<compile_context>
chip_gen: v6e
topology: v6e:2x2x1
jax: 0.10.0
libtpu: 0.0.40
codegen_flags: <defaults>
</compile_context>

<pallas_src>
import jax
import jax.numpy as jnp
from jax.experimental import pallas as pl
from jax.experimental.pallas import tpu as pltpu

ALPHA = 0.01     # leaky slope beyond the cap
BETA = 5.0       # cap value (beta=5 in the module)
LANE = 128       # TPU lane width


def _round_up(n, m):
    return (n + m - 1) // m * m


def _capped_symmetric_leaky_relu(z):
    # TODO(synk): CappedSymmetricLeakyReLU(auto_scale=True, beta=5) source not provided;
    # implemented as the odd (symmetric) function that is identity on [-beta, beta]
    # and leaky (slope ALPHA) beyond.
    c = jnp.clip(z, -BETA, BETA)
    return c + ALPHA * (z - c)


def _default_elementwise_dtype():
    """bf16 elementwise on v6e/v7x (bf16-native VPU/EUP); f32 on older generations."""
    try:
        kind = jax.devices()[0].device_kind.lower()
    except Exception:  # pragma: no cover
        kind = ""
    if any(g in kind for g in ("v2", "v3", "v4", "v5")):
        return jnp.float32
    return jnp.bfloat16


def _make_kernel(n_inner, mxu_dtype, ew_dtype):
    """Fused forward for one tile of pixels.

    refs layout:
      x, w0_eff, b0, [w_i, b_i] * (n_inner-1), w_tail, o_ref
    """
    def kernel(*refs):
        x_ref, w0_ref, b0_ref = refs[0], refs[1], refs[2]
        # input_double (frozen at its [I; -I]/zero-bias double_conv_init) is folded into
        # layer 0:  [x, -x] @ [[Wt], [Wb]] == x @ (Wt - Wb) == x @ W0_eff.
        # TODO(synk): if input_double trains away from its init, pass it as a general
        # (C, 2C) weight and restore that matmul.
        z = jnp.dot(x_ref[...], w0_ref[...], preferred_element_type=jnp.float32)
        z = _capped_symmetric_leaky_relu(z.astype(ew_dtype) + b0_ref[...])

        idx = 3
        for _ in range(n_inner - 1):
            w_ref, b_ref = refs[idx], refs[idx + 1]
            idx += 2
            z = jnp.dot(z.astype(mxu_dtype), w_ref[...],
                        preferred_element_type=jnp.float32)
            z = _capped_symmetric_leaky_relu(z.astype(ew_dtype) + b_ref[...])
            # Dropout(p=0) and Identity agg_op are no-ops.

        # add_last ABBA conv + output_halve folded into a single matmul (both are
        # bias-free and activation-free).
        w_tail_ref, o_ref = refs[idx], refs[idx + 1]
        o_ref[...] = jnp.dot(z.astype(mxu_dtype), w_tail_ref[...],
                             preferred_element_type=jnp.float32).astype(o_ref.dtype)
    return kernel


def fully_conv_abba_forward(x, abba_weights, abba_biases, w_abba_last, w_halve,
                            *, tile_pix=None, mxu_dtype=jnp.bfloat16,
                            out_dtype=jnp.bfloat16, ew_dtype=None):
    """x: (B, C, H, W). Weights are matmul form: conv_weight[:, :, 0, 0].T, i.e.
    (in_features, out_features). Returns NCHW output in `out_dtype`."""
    B, C, H, W = x.shape
    n_inner = len(abba_weights)
    assert n_inner >= 1
    if ew_dtype is None:
        ew_dtype = _default_elementwise_dtype()
    out_ch = w_halve.shape[1]
    out_pad = _round_up(out_ch, LANE)

    # ---- pixel tiling: big tiles amortize ~0.35us/step overhead, but keep >=2 grid
    # steps so the parallel axis can use both v7x TensorCores.
    n_pix = B * H * W
    if tile_pix is None:
        tile_pix = min(1024, max(128, _round_up(max(n_pix // 2, 1), 256)))
    n_pix_pad = _round_up(n_pix, tile_pix)

    # Pixels-as-rows layout (NHWC flattened), cast to the MXU dtype in the same copy.
    xp = jnp.transpose(x, (0, 2, 3, 1)).reshape(n_pix, C).astype(mxu_dtype)
    if n_pix_pad != n_pix:
        xp = jnp.pad(xp, ((0, n_pix_pad - n_pix), (0, 0)))

    def pad_to(a, rows, cols):
        # zero-padding is exact: padded channels stay 0 through linear + activation.
        return jnp.zeros((rows, cols), jnp.float32).at[:a.shape[0], :a.shape[1]].set(
            a.astype(jnp.float32))

    # ---- layer 0: fold input_double into the first ABBA weight (single matmul).
    w0 = abba_weights[0]                     # (2C, 2*ch0)
    w0_eff = w0[:C, :] - w0[C:, :]           # (C, 2*ch0), f32 host fold
    n0 = _round_up(w0.shape[1], LANE)
    w0_p = pad_to(w0_eff, C, n0).astype(mxu_dtype)
    b0_p = pad_to(abba_biases[0], 1, n0).astype(ew_dtype)
    operands = [xp, w0_p, b0_p]
    matmul_weights = [w0_p]

    k_prev = n0
    for w, b in zip(abba_weights[1:], abba_biases[1:]):
        n_pad = _round_up(w.shape[1], LANE)
        wp = pad_to(w, k_prev, n_pad).astype(mxu_dtype)
        operands += [wp, pad_to(b, 1, n_pad).astype(ew_dtype)]
        matmul_weights.append(wp)
        k_prev = n_pad

    # ---- tail fold: add_last ABBA @ output_halve -> one weight.
    w_tail = jnp.dot(w_abba_last, w_halve, precision=jax.lax.Precision.HIGHEST)
    w_tail_p = pad_to(w_tail, k_prev, out_pad).astype(mxu_dtype)
    operands.append(w_tail_p)
    matmul_weights.append(w_tail_p)

    # ---- block specs: activations move with the grid; weights/biases are resident.
    in_specs = [pl.BlockSpec((tile_pix, C), lambda i: (i, 0))]
    for op in operands[1:]:
        in_specs.append(pl.BlockSpec(op.shape, lambda i: (0, 0)))
    out_spec = pl.BlockSpec((tile_pix, out_pad), lambda i: (i, 0))

    # ---- VMEM budget: double-buffered x/out tiles + resident weights + f32 intermediates.
    itemsize = lambda dt: jnp.dtype(dt).itemsize
    weight_bytes = sum(int(op.size) * itemsize(op.dtype) for op in operands[1:])
    x_tile_bytes = tile_pix * C * itemsize(mxu_dtype)
    out_tile_bytes = tile_pix * out_pad * itemsize(out_dtype)
    max_width = max(op.shape[1] for op in operands[1:])
    interm_bytes = 3 * tile_pix * max_width * 4
    vmem_limit = (2 * (x_tile_bytes + out_tile_bytes) + 2 * weight_bytes
                  + interm_bytes + (8 << 20))
    vmem_limit = int(min(max(vmem_limit, 16 << 20), 128 << 20))

    flops = 2 * n_pix_pad * sum(w.shape[0] * w.shape[1] for w in matmul_weights)
    bytes_accessed = (sum(int(op.size) * itemsize(op.dtype) for op in operands)
                      + n_pix_pad * out_pad * itemsize(out_dtype))
    cost = pl.CostEstimate(flops=int(flops), transcendentals=0,
                           bytes_accessed=int(bytes_accessed))

    out = pl.pallas_call(
        _make_kernel(n_inner, mxu_dtype, ew_dtype),
        out_shape=jax.ShapeDtypeStruct((n_pix_pad, out_pad), out_dtype),
        grid=(pl.cdiv(n_pix_pad, tile_pix),),
        in_specs=in_specs,
        out_specs=out_spec,
        compiler_params=pltpu.CompilerParams(
            dimension_semantics=("parallel",),
            vmem_limit_bytes=vmem_limit),
        cost_estimate=cost,
    )(*operands)

    y = out[:n_pix, :out_ch].reshape(B, H, W, out_ch)
    return jnp.transpose(y, (0, 3, 1, 2))


def build_params(in_ch, inner_ch, out_ch, key):
    """Deterministic parameters matching the module's __init__ (1x1-conv config).
    Every conv weight is stored as (in_features, out_features) = weight[:, :, 0, 0].T."""
    # TODO(synk): ABBA_Conv_Layer source not provided; using the canonical ABBA block
    # structure: non-negative A, B (c_out, c_in), block conv weight [[A, B], [B, A]],
    # bias of size 2*c_out for the non-simplified path.
    dims = [in_ch] + list(inner_ch)
    abba_weights, abba_biases = [], []
    for li in range(len(inner_ch)):
        c_in, c_out = dims[li], dims[li + 1]
        key, k1, k2, k3 = jax.random.split(key, 4)
        A = jnp.abs(jax.random.normal(k1, (c_out, c_in), jnp.float32)) * 0.1
        B = jnp.abs(jax.random.normal(k2, (c_out, c_in), jnp.float32)) * 0.1
        Wm = jnp.block([[A.T, B.T], [B.T, A.T]]).astype(jnp.float32)   # (2*c_in, 2*c_out)
        b = jax.random.normal(k3, (1, 2 * c_out), jnp.float32) * 0.1
        abba_weights.append(Wm)
        abba_biases.append(b)

    # add_last: ABBA_Conv_Layer(prev_ch, out_ch, 1, 1, p=0, bias=False)
    c_in = dims[-1]
    key, k1, k2 = jax.random.split(key, 3)
    A = jnp.abs(jax.random.normal(k1, (out_ch, c_in), jnp.float32)) * 0.1
    B = jnp.abs(jax.random.normal(k2, (out_ch, c_in), jnp.float32)) * 0.1
    w_abba_last = jnp.block([[A.T, B.T], [B.T, A.T]]).astype(jnp.float32)  # (2*c_in, 2*out)

    # output_halve: Conv2d(2*out_ch, out_ch, 1x1, bias=False), nn.init.orthogonal_.
    key, kh = jax.random.split(key)
    M = jax.random.normal(kh, (2 * out_ch, out_ch), jnp.float32)
    w_halve, _ = jnp.linalg.qr(M)                                     # orthonormal columns
    return abba_weights, abba_biases, w_abba_last, w_halve.astype(jnp.float32)


def reference_forward(x, abba_weights, abba_biases, w_abba_last, w_halve,
                      dot_dtype=jnp.bfloat16):
    """Pure-JAX FullyConvABBA forward (unfused: explicit input_double, separate add_last
    and output_halve matmuls, f32 elementwise). `dot_dtype` sets the matmul operand
    dtype (bf16 to match the kernel's MXU path, f32 for a full-precision reference)."""
    B, C, H, W = x.shape
    z = jnp.transpose(x, (0, 2, 3, 1)).reshape(-1, C)
    z = jnp.concatenate([z, -z], axis=-1)             # input_double at double_conv_init

    def dot(a, w):
        return jnp.dot(a.astype(dot_dtype), w.astype(dot_dtype),
                       preferred_element_type=jnp.float32)

    for w, b in zip(abba_weights, abba_biases):
        z = _capped_symmetric_leaky_relu(dot(z, w) + b)
    z = dot(z, w_abba_last)                           # add_last ABBA layer (no bias/act)
    y = dot(z, w_halve)                               # output_halve
    out_ch = w_halve.shape[1]
    return jnp.transpose(y.reshape(B, H, W, out_ch), (0, 3, 1, 2))


if __name__ == "__main__":
    batch, in_ch, H, W = 2, 4, 16, 16
    inner_ch = [16, 16]
    out_ch = 8

    key = jax.random.PRNGKey(0)
    key, kx = jax.random.split(key)
    x = jax.random.normal(kx, (batch, in_ch, H, W), jnp.float32)

    abba_ws, abba_bs, w_last, w_halve = build_params(in_ch, inner_ch, out_ch, key)

    y = fully_conv_abba_forward(x, abba_ws, abba_bs, w_last, w_halve)
    y = jax.block_until_ready(y)
    assert y.shape == (batch, out_ch, H, W)
    y32 = y.astype(jnp.float32)

    # Check against the unfused bf16-matmul reference (validates the host-side folds
    # and the fused kernel path).
    y_ref = reference_forward(x, abba_ws, abba_bs, w_last, w_halve, dot_dtype=jnp.bfloat16)
    err = float(jnp.max(jnp.abs(y32 - y_ref)))
    assert jnp.allclose(y32, y_ref, atol=2.5e-2, rtol=2.5e-2), err

    # Also bound the total bf16 error against a pure-f32 reference.
    y_ref32 = reference_forward(x, abba_ws, abba_bs, w_last, w_halve, dot_dtype=jnp.float32)
    err32 = float(jnp.max(jnp.abs(y32 - y_ref32)))
    assert jnp.allclose(y32, y_ref32, atol=5e-2, rtol=5e-2), err32

    print("KERNEL_OK")
</pallas_src>

<mosaic_0001>
module attributes {stable_mosaic.version = 11 : i64} {
  func.func @kernel(%arg0: i32, %arg1: memref<256x4xbf16, #tpu.memory_space<vmem>>, %arg2: memref<4x128xbf16, #tpu.memory_space<vmem>>, %arg3: memref<1x128xbf16, #tpu.memory_space<vmem>>, %arg4: memref<128x128xbf16, #tpu.memory_space<vmem>>, %arg5: memref<1x128xbf16, #tpu.memory_space<vmem>>, %arg6: memref<128x128xbf16, #tpu.memory_space<vmem>>, %arg7: memref<256x128xbf16, #tpu.memory_space<vmem>>) attributes {dimension_semantics = [#tpu.dimension_semantics<parallel>], iteration_bounds = array<i64: 2>, scalar_prefetch = 0 : i64, scratch_operands = 0 : i64, tpu.core_type = #tpu.core_type<tc>, window_params = [{transform_indices = @transform_0, window_bounds = array<i64: 256, 4>}, {pipeline_mode = #tpu.pipeline_mode<synchronous>, transform_indices = @transform_1, window_bounds = array<i64: 4, 128>}, {pipeline_mode = #tpu.pipeline_mode<synchronous>, transform_indices = @transform_2, window_bounds = array<i64: 1, 128>}, {pipeline_mode = #tpu.pipeline_mode<synchronous>, transform_indices = @transform_3, window_bounds = array<i64: 128, 128>}, {pipeline_mode = #tpu.pipeline_mode<synchronous>, transform_indices = @transform_4, window_bounds = array<i64: 1, 128>}, {pipeline_mode = #tpu.pipeline_mode<synchronous>, transform_indices = @transform_5, window_bounds = array<i64: 128, 128>}, {transform_indices = @transform_6, window_bounds = array<i64: 256, 128>}]} {
    %c0 = arith.constant 0 : index
    %c0_0 = arith.constant 0 : index
    %0 = vector.load %arg1[%c0, %c0_0] : memref<256x4xbf16, #tpu.memory_space<vmem>>, vector<256x4xbf16>
    %c0_1 = arith.constant 0 : index
    %c0_2 = arith.constant 0 : index
    %1 = vector.load %arg2[%c0_1, %c0_2] : memref<4x128xbf16, #tpu.memory_space<vmem>>, vector<4x128xbf16>
    %cst = arith.constant dense<0.000000e+00> : vector<256x128xf32>
    %2 = tpu.matmul %0, %1, %cst {dimension_numbers = #tpu.dot_dimension_numbers<[1], [0], [0], [1], [0, 0, 1, 1], [], []>} : vector<256x4xbf16>, vector<4x128xbf16>, vector<256x128xf32> -> vector<256x128xf32>
    %3 = arith.truncf %2 : vector<256x128xf32> to vector<256x128xbf16>
    %c0_3 = arith.constant 0 : index
    %c0_4 = arith.constant 0 : index
    %4 = vector.load %arg3[%c0_3, %c0_4] : memref<1x128xbf16, #tpu.memory_space<vmem>>, vector<1x128xbf16>
    %5 = vector.broadcast %4 : vector<1x128xbf16> to vector<256x128xbf16>
    %6 = arith.addf %3, %5 : vector<256x128xbf16>
    %cst_5 = arith.constant -5.000000e+00 : f32
    %cst_6 = arith.constant 5.000000e+00 : f32
    %7 = arith.truncf %cst_5 : f32 to bf16
    %8 = vector.broadcast %7 : bf16 to vector<256x128xbf16>
    %9 = arith.maximumf %8, %6 : vector<256x128xbf16>
    %10 = arith.truncf %cst_6 : f32 to bf16
    %11 = vector.broadcast %10 : bf16 to vector<256x128xbf16>
    %12 = arith.minimumf %11, %9 : vector<256x128xbf16>
    %13 = arith.subf %6, %12 : vector<256x128xbf16>
    %cst_7 = arith.constant 1.000980e-02 : bf16
    %14 = vector.broadcast %cst_7 : bf16 to vector<256x128xbf16>
    %15 = arith.mulf %14, %13 : vector<256x128xbf16>
    %16 = arith.addf %12, %15 : vector<256x128xbf16>
    %c0_8 = arith.constant 0 : index
    %c0_9 = arith.constant 0 : index
    %17 = vector.load %arg4[%c0_8, %c0_9] : memref<128x128xbf16, #tpu.memory_space<vmem>>, vector<128x128xbf16>
    %cst_10 = arith.constant dense<0.000000e+00> : vector<256x128xf32>
    %18 = tpu.matmul %16, %17, %cst_10 {dimension_numbers = #tpu.dot_dimension_numbers<[1], [0], [0], [1], [0, 0, 1, 1], [], []>} : vector<256x128xbf16>, vector<128x128xbf16>, vector<256x128xf32> -> vector<256x128xf32>
    %19 = arith.truncf %18 : vector<256x128xf32> to vector<256x128xbf16>
    %c0_11 = arith.constant 0 : index
    %c0_12 = arith.constant 0 : index
    %20 = vector.load %arg5[%c0_11, %c0_12] : memref<1x128xbf16, #tpu.memory_space<vmem>>, vector<1x128xbf16>
    %21 = vector.broadcast %20 : vector<1x128xbf16> to vector<256x128xbf16>
    %22 = arith.addf %19, %21 : vector<256x128xbf16>
    %cst_13 = arith.constant -5.000000e+00 : f32
    %cst_14 = arith.constant 5.000000e+00 : f32
    %23 = arith.truncf %cst_13 : f32 to bf16
    %24 = vector.broadcast %23 : bf16 to vector<256x128xbf16>
    %25 = arith.maximumf %24, %22 : vector<256x128xbf16>
    %26 = arith.truncf %cst_14 : f32 to bf16
    %27 = vector.broadcast %26 : bf16 to vector<256x128xbf16>
    %28 = arith.minimumf %27, %25 : vector<256x128xbf16>
    %29 = arith.subf %22, %28 : vector<256x128xbf16>
    %cst_15 = arith.constant 1.000980e-02 : bf16
    %30 = vector.broadcast %cst_15 : bf16 to vector<256x128xbf16>
    %31 = arith.mulf %30, %29 : vector<256x128xbf16>
    %32 = arith.addf %28, %31 : vector<256x128xbf16>
    %c0_16 = arith.constant 0 : index
    %c0_17 = arith.constant 0 : index
    %33 = vector.load %arg6[%c0_16, %c0_17] : memref<128x128xbf16, #tpu.memory_space<vmem>>, vector<128x128xbf16>
    %cst_18 = arith.constant dense<0.000000e+00> : vector<256x128xf32>
    %34 = tpu.matmul %32, %33, %cst_18 {dimension_numbers = #tpu.dot_dimension_numbers<[1], [0], [0], [1], [0, 0, 1, 1], [], []>} : vector<256x128xbf16>, vector<128x128xbf16>, vector<256x128xf32> -> vector<256x128xf32>
    %35 = arith.truncf %34 : vector<256x128xf32> to vector<256x128xbf16>
    %c0_19 = arith.constant 0 : index
    %c0_20 = arith.constant 0 : index
    %36 = vector.load %arg7[%c0_19, %c0_20] : memref<256x128xbf16, #tpu.memory_space<vmem>>, vector<256x128xbf16>
    tpu.vector_store %arg7[%c0_19, %c0_20], %35 {strides = array<i32>} : memref<256x128xbf16, #tpu.memory_space<vmem>>, vector<256x128xbf16>,
    return
  }
  func.func @transform_0(%arg0: i32) -> (i32, i32) {
    %c0_i32 = arith.constant 0 : i32
    %c0_i32_0 = arith.constant 0 : i32
    return %arg0, %c0_i32 : i32, i32
  }
  func.func @transform_1(%arg0: i32) -> (i32, i32) {
    %c0_i32 = arith.constant 0 : i32
    %c0_i32_0 = arith.constant 0 : i32
    %c0_i32_1 = arith.constant 0 : i32
    return %c0_i32, %c0_i32_0 : i32, i32
  }
  func.func @transform_2(%arg0: i32) -> (i32, i32) {
    %c0_i32 = arith.constant 0 : i32
    %c0_i32_0 = arith.constant 0 : i32
    %c0_i32_1 = arith.constant 0 : i32
    return %c0_i32, %c0_i32_0 : i32, i32
  }
  func.func @transform_3(%arg0: i32) -> (i32, i32) {
    %c0_i32 = arith.constant 0 : i32
    %c0_i32_0 = arith.constant 0 : i32
    %c0_i32_1 = arith.constant 0 : i32
    return %c0_i32, %c0_i32_0 : i32, i32
  }
  func.func @transform_4(%arg0: i32) -> (i32, i32) {
    %c0_i32 = arith.constant 0 : i32
    %c0_i32_0 = arith.constant 0 : i32
    %c0_i32_1 = arith.constant 0 : i32
    return %c0_i32, %c0_i32_0 : i32, i32
  }
  func.func @transform_5(%arg0: i32) -> (i32, i32) {
    %c0_i32 = arith.constant 0 : i32
    %c0_i32_0 = arith.constant 0 : i32
    %c0_i32_1 = arith.constant 0 : i32
    return %c0_i32, %c0_i32_0 : i32, i32
  }
  func.func @transform_6(%arg0: i32) -> (i32, i32) {
    %c0_i32 = arith.constant 0 : i32
    %c0_i32_0 = arith.constant 0 : i32
    return %arg0, %c0_i32 : i32, i32
  }
}

</mosaic_0001>

<llo_original>
// kernel: tpu_custom_call.1
$region0: #{tpu_custom_call.1}
  #allocation0 [shape = 'u32[]', space=smem, size = 0x4, offset = 0x4, fixed_abs, tag = 'smem constant byte address 0x4 - core index']
  #allocation1 [shape = 'u32[144,128]{1,0:T(1,128)}', space=vmem, size = 0x12000, scoped, tag = 'internal scratch']
  %s0 = inlined_call_operand.vmem [shape: bf16[512,4], index: 0, kind: input, shape index: {}]
  %s1 = inlined_call_operand.vmem [shape: bf16[4,128], index: 1, kind: input, shape index: {}]
  %s2 = inlined_call_operand.vmem [shape: bf16[1,128], index: 2, kind: input, shape index: {}]
  %s3 = inlined_call_operand.vmem [shape: bf16[128,128], index: 3, kind: input, shape index: {}]
  %s4 = inlined_call_operand.vmem [shape: bf16[1,128], index: 4, kind: input, shape index: {}]
  %s5 = inlined_call_operand.vmem [shape: bf16[128,128], index: 5, kind: input, shape index: {}]
  %s6 = inlined_call_operand.hbm [shape: bf16[512,128], index: 6, kind: output, shape index: {}]
  %s7 = sld [smem:[#allocation0]]
  $region57: #{tpu_custom_call.1} parent=0
    _
  %s9 = ssub.s32 1, %s7
  %s10 = scalar_select 0, %s9, %s7
  $region1: #{tpu_custom_call.1} parent=0
    #allocation2 [shape = 'u8[131072]{0}', space=vmem, size = 0x20000, scoped, tag = 'output window, operand 0']
    #allocation3 [shape = 's32[2]{0}', space=sflag, size = 0x8, scoped, tag = 'scoped memory for tpu_custom_call.1']
    %11 = vsyncpa [#allocation3], 0
    %s12 = scalar_lea.sflag [#allocation3], 1
    %13 = vsyncpa %s12, 0
    loop: start=0, step=1, limit=4
    $region2: #{tpu_custom_call.1} parent=1 // loop_pre_header
      _
    $region3: #{tpu_custom_call.1} parent=1 // loop_header
      %s15 = sphi 0, %s19
      %p16 = scmp.ge.s32.totalorder %s15, 4
      %s25 = sphi 0, %s27
      %s28 = sphi 0, %s25
      %s29 = sphi 0, %s28
      %s45 = sphi 0, %s29
      %s49 = sphi 0, %s49
      %s51 = sphi 0, %s49
      %s52 = sphi 0, %s51
      %s66 = sphi 0, %s52
      %s70 = sphi 0, %s70
      %s72 = sphi 0, %s70
      %s73 = sphi 0, %s72
      %s87 = sphi 0, %s73
      %s91 = sphi 0, %s91
      %s93 = sphi 0, %s91
      %s94 = sphi 0, %s93
      %s108 = sphi 0, %s94
      %s112 = sphi 0, %s112
      %s114 = sphi 0, %s112
      %s115 = sphi 0, %s114
      %s129 = sphi 0, %s115
      %s133 = sphi 0, %s133
      %s135 = sphi 0, %s133
      %s136 = sphi 0, %s135
      %s150 = sphi 0, %s136
      %s156 = sphi 0, %s158
      %s159 = sphi 0, %s156
      %s160 = sphi 0, %s159
      %s176 = sphi 0, %s160
    $region4: #{tpu_custom_call.1} parent=1 // loop_header_branch
      %18 = sbr.rel (%p16) target = $region8
    $region5: #{tpu_custom_call.1} parent=1 // loop_body
      %s20 = ssub.s32 %s15, 1
      %s21 = ssub.s32 %s15, 2
      %s22 = sadd.s32 %s15, 1
      %s23 = ssub.s32 %s15, %s22
      %p24 = scmp.eq.s32.totalorder %s23, 0
      %s26 = sadd.s32 %s25, 1
      %s27 = scalar_select %p24, %s25, %s26
      %p30 = pneg %p24
      %p31 = scmp.eq.s32.totalorder %s15, 1
      %p32 = por %p30, %p31
      %p33 = scmp.ne.s32.totalorder %s25, %s28
      %p34 = scmp.eq.s32.totalorder %s15, 0
      %p35 = por %p33, %p34
      %p36 = scmp.ne.s32.totalorder %s25, %s28
      %p37 = scmp.eq.s32.totalorder %s20, 1
      %p38 = por %p36, %p37
      %p39 = scmp.ne.s32.totalorder %s28, %s29
      %p40 = scmp.eq.s32.totalorder %s20, 0
      %p41 = por %p39, %p40
      %p42 = scmp.ne.s32.totalorder %s28, %s29
      %p43 = scmp.eq.s32.totalorder %s21, 1
      %p44 = por %p42, %p43
      %p46 = scmp.ne.s32.totalorder %s29, %s45
      %p47 = scmp.eq.s32.totalorder %s21, 0
      %p48 = por %p46, %p47
      %s50 = sadd.s32 %s49, 1
      %p53 = scmp.eq.s32.totalorder %s15, 1
      %p54 = scmp.ne.s32.totalorder %s49, %s51
      %p55 = scmp.eq.s32.totalorder %s15, 0
      %p56 = por %p54, %p55
      %p57 = scmp.ne.s32.totalorder %s49, %s51
      %p58 = scmp.eq.s32.totalorder %s20, 1
      %p59 = por %p57, %p58
      %p60 = scmp.ne.s32.totalorder %s51, %s52
      %p61 = scmp.eq.s32.totalorder %s20, 0
      %p62 = por %p60, %p61
      %p63 = scmp.ne.s32.totalorder %s51, %s52
      %p64 = scmp.eq.s32.totalorder %s21, 1
      %p65 = por %p63, %p64
      %p67 = scmp.ne.s32.totalorder %s52, %s66
      %p68 = scmp.eq.s32.totalorder %s21, 0
      %p69 = por %p67, %p68
      %s71 = sadd.s32 %s70, 1
      %p74 = scmp.eq.s32.totalorder %s15, 1
      %p75 = scmp.ne.s32.totalorder %s70, %s72
      %p76 = scmp.eq.s32.totalorder %s15, 0
      %p77 = por %p75, %p76
      %p78 = scmp.ne.s32.totalorder %s70, %s72
      %p79 = scmp.eq.s32.totalorder %s20, 1
      %p80 = por %p78, %p79
      %p81 = scmp.ne.s32.totalorder %s72, %s73
      %p82 = scmp.eq.s32.totalorder %s20, 0
      %p83 = por %p81, %p82
      %p84 = scmp.ne.s32.totalorder %s72, %s73
      %p85 = scmp.eq.s32.totalorder %s21, 1
      %p86 = por %p84, %p85
      %p88 = scmp.ne.s32.totalorder %s73, %s87
      %p89 = scmp.eq.s32.totalorder %s21, 0
      %p90 = por %p88, %p89
      %s92 = sadd.s32 %s91, 1
      %p95 = scmp.eq.s32.totalorder %s15, 1
      %p96 = scmp.ne.s32.totalorder %s91, %s93
      %p97 = scmp.eq.s32.totalorder %s15, 0
      %p98 = por %p96, %p97
      %p99 = scmp.ne.s32.totalorder %s91, %s93
      %p100 = scmp.eq.s32.totalorder %s20, 1
      %p101 = por %p99, %p100
      %p102 = scmp.ne.s32.totalorder %s93, %s94
      %p103 = scmp.eq.s32.totalorder %s20, 0
      %p104 = por %p102, %p103
      %p105 = scmp.ne.s32.totalorder %s93, %s94
      %p106 = scmp.eq.s32.totalorder %s21, 1
      %p107 = por %p105, %p106
      %p109 = scmp.ne.s32.totalorder %s94, %s108
      %p110 = scmp.eq.s32.totalorder %s21, 0
      %p111 = por %p109, %p110
      %s113 = sadd.s32 %s112, 1
      %p116 = scmp.eq.s32.totalorder %s15, 1
      %p117 = scmp.ne.s32.totalorder %s112, %s114
      %p118 = scmp.eq.s32.totalorder %s15, 0
      %p119 = por %p117, %p118
      %p120 = scmp.ne.s32.totalorder %s112, %s114
      %p121 = scmp.eq.s32.totalorder %s20, 1
      %p122 = por %p120, %p121
      %p123 = scmp.ne.s32.totalorder %s114, %s115
      %p124 = scmp.eq.s32.totalorder %s20, 0
      %p125 = por %p123, %p124
      %p126 = scmp.ne.s32.totalorder %s114, %s115
      %p127 = scmp.eq.s32.totalorder %s21, 1
      %p128 = por %p126, %p127
      %p130 = scmp.ne.s32.totalorder %s115, %s129
      %p131 = scmp.eq.s32.totalorder %s21, 0
      %p132 = por %p130, %p131
      %s134 = sadd.s32 %s133, 1
      %p137 = scmp.eq.s32.totalorder %s15, 1
      %p138 = scmp.ne.s32.totalorder %s133, %s135
      %p139 = scmp.eq.s32.totalorder %s15, 0
      %p140 = por %p138, %p139
      %p141 = scmp.ne.s32.totalorder %s133, %s135
      %p142 = scmp.eq.s32.totalorder %s20, 1
      %p143 = por %p141, %p142
      %p144 = scmp.ne.s32.totalorder %s135, %s136
      %p145 = scmp.eq.s32.totalorder %s20, 0
      %p146 = por %p144, %p145
      %p147 = scmp.ne.s32.totalorder %s135, %s136
      %p148 = scmp.eq.s32.totalorder %s21, 1
      %p149 = por %p147, %p148
      %p151 = scmp.ne.s32.totalorder %s136, %s150
      %p152 = scmp.eq.s32.totalorder %s21, 0
      %p153 = por %p151, %p152
      %s154 = ssub.s32 %s15, %s22
      %p155 = scmp.eq.s32.totalorder %s154, 0
      %s157 = sadd.s32 %s156, 1
      %s158 = scalar_select %p155, %s156, %s157
      %p161 = pneg %p155
      %p162 = scmp.eq.s32.totalorder %s15, 1
      %p163 = por %p161, %p162
      %p164 = scmp.ne.s32.totalorder %s156, %s159
      %p165 = scmp.eq.s32.totalorder %s15, 0
      %p166 = por %p164, %p165
      %p167 = scmp.ne.s32.totalorder %s156, %s159
      %p168 = scmp.eq.s32.totalorder %s20, 1
      %p169 = por %p167, %p168
      %p170 = scmp.ne.s32.totalorder %s159, %s160
      %p171 = scmp.eq.s32.totalorder %s20, 0
      %p172 = por %p170, %p171
      %p173 = scmp.ne.s32.totalorder %s159, %s160
      %p174 = scmp.eq.s32.totalorder %s21, 1
      %p175 = por %p173, %p174
      %p177 = scmp.ne.s32.totalorder %s160, %s176
      %p178 = scmp.eq.s32.totalorder %s21, 0
      %p179 = por %p177, %p178
      %p180 = scmp.le.s32.totalorder 1, %s15
      %p181 = scmp.lt.s32.totalorder %s15, 3
      %p182 = pnand %p180, %p181
      %p183 = pneg %p182
      // Predicated region
      $region9: #{tpu_custom_call.1} parent=5 // pred_check
        _
      $region10: #{tpu_custom_call.1} parent=5 // pred_check_branch
        %185 = sbr.rel (%p182) target = $region12
      $region11: #{tpu_custom_call.1} parent=5 // pred_region
        %s186 = ssub.s32 %s15, 1
        // Predicated region
        $region13: #{tpu_custom_call.1} parent=11 // pred_check
          %p187 = pneg %p62
        $region14: #{tpu_custom_call.1} parent=11 // pred_check_branch
          %189 = sbr.rel (%p187) target = $region16
        $region15: #{tpu_custom_call.1} parent=11 // pred_region
          _
        $region16: #{tpu_custom_call.1} parent=11 // pred_fallthru
          _
        // Predicated region
        $region17: #{tpu_custom_call.1} parent=11 // pred_check
          %p190 = pneg %p83
        $region18: #{tpu_custom_call.1} parent=11 // pred_check_branch
          %192 = sbr.rel (%p190) target = $region20
        $region19: #{tpu_custom_call.1} parent=11 // pred_region
          _
        $region20: #{tpu_custom_call.1} parent=11 // pred_fallthru
          _
        // Predicated region
        $region21: #{tpu_custom_call.1} parent=11 // pred_check
          %p193 = pneg %p104
        $region22: #{tpu_custom_call.1} parent=11 // pred_check_branch
          %195 = sbr.rel (%p193) target = $region24
        $region23: #{tpu_custom_call.1} parent=11 // pred_region
          _
        $region24: #{tpu_custom_call.1} parent=11 // pred_fallthru
          _
        // Predicated region
        $region25: #{tpu_custom_call.1} parent=11 // pred_check
          %p196 = pneg %p125
        $region26: #{tpu_custom_call.1} parent=11 // pred_check_branch
          %198 = sbr.rel (%p196) target = $region28
        $region27: #{tpu_custom_call.1} parent=11 // pred_region
          _
        $region28: #{tpu_custom_call.1} parent=11 // pred_fallthru
          _
        // Predicated region
        $region29: #{tpu_custom_call.1} parent=11 // pred_check
          %p199 = pneg %p146
        $region30: #{tpu_custom_call.1} parent=11 // pred_check_branch
          %201 = sbr.rel (%p199) target = $region32
        $region31: #{tpu_custom_call.1} parent=11 // pred_region
          _
        $region32: #{tpu_custom_call.1} parent=11 // pred_fallthru
          _
      $region12: #{tpu_custom_call.1} parent=5 // pred_fallthru
        _
      %p202 = scmp.lt.s32.totalorder %s15, 2
      // Predicated region
      $region33: #{tpu_custom_call.1} parent=5 // pred_check
        %p203 = pneg %p202
      $region34: #{tpu_custom_call.1} parent=5 // pred_check_branch
        %205 = sbr.rel (%p203) target = $region36
      $region35: #{tpu_custom_call.1} parent=5 // pred_region
        // Predicated region
        $region37: #{tpu_custom_call.1} parent=35 // pred_check
          %p206 = pneg %p35
        $region38: #{tpu_custom_call.1} parent=35 // pred_check_branch
          %208 = sbr.rel (%p206) target = $region40
        $region39: #{tpu_custom_call.1} parent=35 // pred_region
          %s209 = smul.u32 32, %s15
          %p210 = scmp.lt.s32.totalorder %s209, 63
          %s211 = scalar_select %p210, %s209, 63
          %s212 = smul.addr %s211, 4
          %s213 = scalar_lea.vmem %s0, %s212
          %s214 = smul.u32 32, %s15
        $region40: #{tpu_custom_call.1} parent=35 // pred_fallthru
          _
      $region36: #{tpu_custom_call.1} parent=5 // pred_fallthru
        _
      %p215 = scmp.le.s32.totalorder 1, %s15
      %p216 = scmp.lt.s32.totalorder %s15, 3
      %p217 = pnand %p215, %p216
      %p218 = pneg %p217
      // Predicated region
      $region41: #{tpu_custom_call.1} parent=5 // pred_check
        _
      $region42: #{tpu_custom_call.1} parent=5 // pred_check_branch
        %220 = sbr.rel (%p217) target = $region44
      $region43: #{tpu_custom_call.1} parent=5 // pred_region
        %s221 = ssub.s32 %s15, 1
        %s222 = smul.u32 32, %s20
        %p223 = scmp.lt.s32.totalorder %s222, 63
        %s224 = scalar_select %p223, %s222, 63
        %s225 = smul.addr %s224, 4
        %s226 = scalar_lea.vmem %s0, %s225
        %p227 = pneg %p41
        %p228 = pneg %p38
        %p229 = pneg %p62
        %p230 = pneg %p59
        %p231 = pneg %p83
        %p232 = pneg %p80
        %p233 = pneg %p104
        %p234 = pneg %p101
        %p235 = pneg %p125
        %p236 = pneg %p122
        %p237 = pneg %p146
        %p238 = pneg %p143
        %p239 = pneg %p172
        %p240 = pneg %p169
        %s241 = sand.u32 %s159, 1
        %s242 = scalar_lea.sflag [#allocation3], %s241
        %s243 = sand.u32 %s159, 1
        %s244 = smul.addr %s243, 128
        %s245 = scalar_lea.vmem [#allocation2], %s244
        %s246 = smul.u32 32, %s20
        %p247 = scmp.lt.s32.totalorder %s246, 63
        %s248 = scalar_select %p247, %s246, 63
        %s249 = smul.addr %s248, 4
        %s250 = scalar_lea.vmem %s0, %s249
        %s251 = smul.u32 32, %s20
        %s252 = smul.u32 32, %s20
        %v257 = vld [vmem:[%s250] sm:$0xf]
        %v258 = vld [vmem:[%s250 + $0x4] sm:$0xf]
        %v259 = vld [vmem:[%s250 + $0x8] sm:$0xf]
        %v260 = vld [vmem:[%s250 + $0xc] sm:$0xf]
        %v261 = vld [vmem:[%s250 + $0x10] sm:$0xf]
        %v262 = vld [vmem:[%s250 + $0x14] sm:$0xf]
        %v263 = vld [vmem:[%s250 + $0x18] sm:$0xf]
        %v264 = vld [vmem:[%s250 + $0x1c] sm:$0xf]
        %v265 = vld [vmem:[%s250 + $0x20] sm:$0xf]
        %v266 = vld [vmem:[%s250 + $0x24] sm:$0xf]
        %v267 = vld [vmem:[%s250 + $0x28] sm:$0xf]
        %v268 = vld [vmem:[%s250 + $0x2c] sm:$0xf]
        %v269 = vld [vmem:[%s250 + $0x30] sm:$0xf]
        %v270 = vld [vmem:[%s250 + $0x34] sm:$0xf]
        %v271 = vld [vmem:[%s250 + $0x38] sm:$0xf]
        %v272 = vld [vmem:[%s250 + $0x3c] sm:$0xf]
        %v273 = vld [vmem:[%s250 + $0x40] sm:$0xf]
        %v274 = vld [vmem:[%s250 + $0x44] sm:$0xf]
        %v275 = vld [vmem:[%s250 + $0x48] sm:$0xf]
        %v276 = vld [vmem:[%s250 + $0x4c] sm:$0xf]
        %v277 = vld [vmem:[%s250 + $0x50] sm:$0xf]
        %v278 = vld [vmem:[%s250 + $0x54] sm:$0xf]
        %v279 = vld [vmem:[%s250 + $0x58] sm:$0xf]
        %v280 = vld [vmem:[%s250 + $0x5c] sm:$0xf]
        %v281 = vld [vmem:[%s250 + $0x60] sm:$0xf]
        %v282 = vld [vmem:[%s250 + $0x64] sm:$0xf]
        %v283 = vld [vmem:[%s250 + $0x68] sm:$0xf]
        %v284 = vld [vmem:[%s250 + $0x6c] sm:$0xf]
        %v285 = vld [vmem:[%s250 + $0x70] sm:$0xf]
        %v286 = vld [vmem:[%s250 + $0x74] sm:$0xf]
        %v287 = vld [vmem:[%s250 + $0x78] sm:$0xf]
        %v288 = vld [vmem:[%s250 + $0x7c] sm:$0xf]
        %v289 = vld [vmem:[%s1] sm:$0x3]
        %v322 = vunpack.c.l.b16 %v257
        %v323 = vunpack.c.l.b16 %v258
        %v324 = vunpack.c.l.b16 %v259
        %v325 = vunpack.c.l.b16 %v260
        %v326 = vunpack.c.l.b16 %v261
        %v327 = vunpack.c.l.b16 %v262
        %v328 = vunpack.c.l.b16 %v263
        %v329 = vunpack.c.l.b16 %v264
        %v330 = vunpack.c.l.b16 %v265
        %v331 = vunpack.c.l.b16 %v266
        %v332 = vunpack.c.l.b16 %v267
        %v333 = vunpack.c.l.b16 %v268
        %v334 = vunpack.c.l.b16 %v269
        %v335 = vunpack.c.l.b16 %v270
        %v336 = vunpack.c.l.b16 %v271
        %v337 = vunpack.c.l.b16 %v272
        %v338 = vunpack.c.l.b16 %v273
        %v339 = vunpack.c.l.b16 %v274
        %v340 = vunpack.c.l.b16 %v275
        %v341 = vunpack.c.l.b16 %v276
        %v342 = vunpack.c.l.b16 %v277
        %v343 = vunpack.c.l.b16 %v278
        %v344 = vunpack.c.l.b16 %v279
        %v345 = vunpack.c.l.b16 %v280
        %v346 = vunpack.c.l.b16 %v281
        %v347 = vunpack.c.l.b16 %v282
        %v348 = vunpack.c.l.b16 %v283
        %v349 = vunpack.c.l.b16 %v284
        %v350 = vunpack.c.l.b16 %v285
        %v351 = vunpack.c.l.b16 %v286
        %v352 = vunpack.c.l.b16 %v287
        %v353 = vunpack.c.l.b16 %v288
        %v354 = vpack.c.b16 %v323, %v322
        %v355 = vpack.c.b16 %v325, %v324
        %v356 = vpack.c.b16 %v327, %v326
        %v357 = vpack.c.b16 %v329, %v328
        %v358 = vpack.c.b16 %v331, %v330
        %v359 = vpack.c.b16 %v333, %v332
        %v360 = vpack.c.b16 %v335, %v334
        %v361 = vpack.c.b16 %v337, %v336
        %v362 = vpack.c.b16 %v339, %v338
        %v363 = vpack.c.b16 %v341, %v340
        %v364 = vpack.c.b16 %v343, %v342
        %v365 = vpack.c.b16 %v345, %v344
        %v366 = vpack.c.b16 %v347, %v346
        %v367 = vpack.c.b16 %v349, %v348
        %v368 = vpack.c.b16 %v351, %v350
        %v369 = vpack.c.b16 %v353, %v352
        %vm370 = vcmask 31744
        %v372 = vsel %vm370, %v354, 0
        %v375 = vsel %vm370, %v355, 0
        %v378 = vsel %vm370, %v356, 0
        %v381 = vsel %vm370, %v357, 0
        %v384 = vsel %vm370, %v358, 0
        %v387 = vsel %vm370, %v359, 0
        %v390 = vsel %vm370, %v360, 0
        %v393 = vsel %vm370, %v361, 0
        %v396 = vsel %vm370, %v362, 0
        %v399 = vsel %vm370, %v363, 0
        %v402 = vsel %vm370, %v364, 0
        %v405 = vsel %vm370, %v365, 0
        %v408 = vsel %vm370, %v366, 0
        %v411 = vsel %vm370, %v367, 0
        %v414 = vsel %vm370, %v368, 0
        %v417 = vsel %vm370, %v369, 0
        %vm419 = vcmask 1041408
        %v421 = vsel %vm419, %v289, 0
        %423 = vmatprep.subr.bf16.mxu0 0
        %424 = vmatpush1.bf16.msra.mxu0 0
        %425 = vmatprep.subr.bf16.mxu0 0
        %426 = vmatpush1.bf16.msra.mxu0 0
        %427 = vmatprep.subr.bf16.mxu0 0
        %428 = vmatpush1.bf16.msra.mxu0 0
        %429 = vmatprep.subr.bf16.mxu0 0
        %430 = vmatpush1.bf16.msra.mxu0 0
        %431 = vmatprep.subr.bf16.mxu0 0
        %432 = vmatpush1.bf16.msra.mxu0 0
        %433 = vmatprep.subr.bf16.mxu0 0
        %434 = vmatpush1.bf16.msra.mxu0 0
        %435 = vmatprep.subr.bf16.mxu0 0
        %436 = vmatpush1.bf16.msra.mxu0 0
        %437 = vmatprep.subr.bf16.mxu0 0
        %438 = vmatpush1.bf16.msra.mxu0 %v421
        %439 = vmatprep.subr.bf16.mxu0 0
        %440 = vmatpush2.bf16.msra.mxu0 0
        %441 = vmatprep.subr.bf16.mxu0 0
        %442 = vmatpush2.bf16.msra.mxu0 0
        %443 = vmatprep.subr.bf16.mxu0 0
        %444 = vmatpush2.bf16.msra.mxu0 0
        %445 = vmatprep.subr.bf16.mxu0 0
        %446 = vmatpush2.bf16.msra.mxu0 0
        %447 = vmatprep.subr.bf16.mxu0 0
        %448 = vmatpush2.bf16.msra.mxu0 0
        %449 = vmatprep.subr.bf16.mxu0 0
        %450 = vmatpush2.bf16.msra.mxu0 0
        %451 = vmatprep.subr.bf16.mxu0 0
        %452 = vmatpush2.bf16.msra.mxu0 0
        %453 = vmatprep.subr.bf16.mxu0 0
        %454 = vmatpush2.bf16.msra.mxu0 0
        %455 = vmatprep.mubr.bf16.mxu0 0
        %456 = vmatmul.mubr.bf16.gmra.mxu0 %v372
        %v457 = vpop.f32.mrf.mxu0
        %v458 = vadd.f32 0.0, %v457
        %v459 = vpop.f32.mrf.mxu0
        %v460 = vpop.f32.mrf.mxu0
        %v461 = vadd.f32 0.0, %v460
        %v462 = vpop.f32.mrf.mxu0
        %463 = vmatprep.mubr.bf16.mxu0 0
        %464 = vmatmul.mubr.bf16.gmra.mxu0 %v375
        %v465 = vpop.f32.mrf.mxu0
        %v466 = vadd.f32 0.0, %v465
        %v467 = vpop.f32.mrf.mxu0
        %v468 = vpop.f32.mrf.mxu0
        %v469 = vadd.f32 0.0, %v468
        %v470 = vpop.f32.mrf.mxu0
        %471 = vmatprep.mubr.bf16.mxu0 0
        %472 = vmatmul.mubr.bf16.gmra.mxu0 %v378
        %v473 = vpop.f32.mrf.mxu0
        %v474 = vadd.f32 0.0, %v473
        %v475 = vpop.f32.mrf.mxu0
        %v476 = vpop.f32.mrf.mxu0
        %v477 = vadd.f32 0.0, %v476
        %v478 = vpop.f32.mrf.mxu0
        %479 = vmatprep.mubr.bf16.mxu0 0
        %480 = vmatmul.mubr.bf16.gmra.mxu0 %v381
        %v481 = vpop.f32.mrf.mxu0
        %v482 = vadd.f32 0.0, %v481
        %v483 = vpop.f32.mrf.mxu0
        %v484 = vpop.f32.mrf.mxu0
        %v485 = vadd.f32 0.0, %v484
        %v486 = vpop.f32.mrf.mxu0
        %487 = vmatprep.mubr.bf16.mxu0 0
        %488 = vmatmul.mubr.bf16.gmra.mxu0 %v384
        %v489 = vpop.f32.mrf.mxu0
        %v490 = vadd.f32 0.0, %v489
        %v491 = vpop.f32.mrf.mxu0
        %v492 = vpop.f32.mrf.mxu0
        %v493 = vadd.f32 0.0, %v492
        %v494 = vpop.f32.mrf.mxu0
        %495 = vmatprep.mubr.bf16.mxu0 0
        %496 = vmatmul.mubr.bf16.gmra.mxu0 %v387
        %v497 = vpop.f32.mrf.mxu0
        %v498 = vadd.f32 0.0, %v497
        %v499 = vpop.f32.mrf.mxu0
        %v500 = vpop.f32.mrf.mxu0
        %v501 = vadd.f32 0.0, %v500
        %v502 = vpop.f32.mrf.mxu0
        %503 = vmatprep.mubr.bf16.mxu0 0
        %504 = vmatmul.mubr.bf16.gmra.mxu0 %v390
        %v505 = vpop.f32.mrf.mxu0
        %v506 = vadd.f32 0.0, %v505
        %v507 = vpop.f32.mrf.mxu0
        %v508 = vpop.f32.mrf.mxu0
        %v509 = vadd.f32 0.0, %v508
        %v510 = vpop.f32.mrf.mxu0
        %511 = vmatprep.mubr.bf16.mxu0 0
        %512 = vmatmul.mubr.bf16.gmra.mxu0 %v393
        %v513 = vpop.f32.mrf.mxu0
        %v514 = vadd.f32 0.0, %v513
        %v515 = vpop.f32.mrf.mxu0
        %v516 = vpop.f32.mrf.mxu0
        %v517 = vadd.f32 0.0, %v516
        %v518 = vpop.f32.mrf.mxu0
        %519 = vmatprep.mubr.bf16.mxu0 0
        %520 = vmatmul.mubr.bf16.gmra.mxu0 %v396
        %v521 = vpop.f32.mrf.mxu0
        %v522 = vadd.f32 0.0, %v521
        %v523 = vpop.f32.mrf.mxu0
        %v524 = vpop.f32.mrf.mxu0
        %v525 = vadd.f32 0.0, %v524
        %v526 = vpop.f32.mrf.mxu0
        %527 = vmatprep.mubr.bf16.mxu0 0
        %528 = vmatmul.mubr.bf16.gmra.mxu0 %v399
        %v529 = vpop.f32.mrf.mxu0
        %v530 = vadd.f32 0.0, %v529
        %v531 = vpop.f32.mrf.mxu0
        %v532 = vpop.f32.mrf.mxu0
        %v533 = vadd.f32 0.0, %v532
        %v534 = vpop.f32.mrf.mxu0
        %535 = vmatprep.mubr.bf16.mxu0 0
        %536 = vmatmul.mubr.bf16.gmra.mxu0 %v402
        %v537 = vpop.f32.mrf.mxu0
        %v538 = vadd.f32 0.0, %v537
        %v539 = vpop.f32.mrf.mxu0
        %v540 = vpop.f32.mrf.mxu0
        %v541 = vadd.f32 0.0, %v540
        %v542 = vpop.f32.mrf.mxu0
        %543 = vmatprep.mubr.bf16.mxu0 0
        %544 = vmatmul.mubr.bf16.gmra.mxu0 %v405
        %v545 = vpop.f32.mrf.mxu0
        %v546 = vadd.f32 0.0, %v545
        %v547 = vpop.f32.mrf.mxu0
        %v548 = vpop.f32.mrf.mxu0
        %v549 = vadd.f32 0.0, %v548
        %v550 = vpop.f32.mrf.mxu0
        %551 = vmatprep.mubr.bf16.mxu0 0
        %552 = vmatmul.mubr.bf16.gmra.mxu0 %v408
        %v553 = vpop.f32.mrf.mxu0
        %v554 = vadd.f32 0.0, %v553
        %v555 = vpop.f32.mrf.mxu0
        %v556 = vpop.f32.mrf.mxu0
        %v557 = vadd.f32 0.0, %v556
        %v558 = vpop.f32.mrf.mxu0
        %559 = vmatprep.mubr.bf16.mxu0 0
        %560 = vmatmul.mubr.bf16.gmra.mxu0 %v411
        %v561 = vpop.f32.mrf.mxu0
        %v562 = vadd.f32 0.0, %v561
        %v563 = vpop.f32.mrf.mxu0
        %v564 = vpop.f32.mrf.mxu0
        %v565 = vadd.f32 0.0, %v564
        %v566 = vpop.f32.mrf.mxu0
        %567 = vmatprep.mubr.bf16.mxu0 0
        %568 = vmatmul.mubr.bf16.gmra.mxu0 %v414
        %v569 = vpop.f32.mrf.mxu0
        %v570 = vadd.f32 0.0, %v569
        %v571 = vpop.f32.mrf.mxu0
        %v572 = vpop.f32.mrf.mxu0
        %v573 = vadd.f32 0.0, %v572
        %v574 = vpop.f32.mrf.mxu0
        %575 = vmatprep.mubr.bf16.mxu0 0
        %576 = vmatmul.mubr.bf16.gmra.mxu0 %v417
        %v577 = vpop.f32.mrf.mxu0
        %v578 = vadd.f32 0.0, %v577
        %v579 = vpop.f32.mrf.mxu0
        %v580 = vpop.f32.mrf.mxu0
        %v581 = vadd.f32 0.0, %v580
        %v582 = vpop.f32.mrf.mxu0
        %583 = vdwg.mxu0
        %v584 = vpack.c.bf16 %v461, %v458
        %v585 = vpack.c.bf16 %v469, %v466
        %v586 = vpack.c.bf16 %v477, %v474
        %v587 = vpack.c.bf16 %v485, %v482
        %v588 = vpack.c.bf16 %v493, %v490
        %v589 = vpack.c.bf16 %v501, %v498
        %v590 = vpack.c.bf16 %v509, %v506
        %v591 = vpack.c.bf16 %v517, %v514
        %v592 = vpack.c.bf16 %v525, %v522
        %v593 = vpack.c.bf16 %v533, %v530
        %v594 = vpack.c.bf16 %v541, %v538
        %v595 = vpack.c.bf16 %v549, %v546
        %v596 = vpack.c.bf16 %v557, %v554
        %v597 = vpack.c.bf16 %v565, %v562
        %v598 = vpack.c.bf16 %v573, %v570
        %v599 = vpack.c.bf16 %v581, %v578
        %v600 = vld [vmem:[%s2] sm:$0x1]
        %v602 = vpack.i.b16 %v600, %v600
        %v604 = vlaneseq
        %v605 = vshrl.u32 %v604, 7
        %v606 = vsub.s32 0, %v605
        %v607 = vrot.slane %v602, %v606
        %v608 = vadd.bf16 %v584, %v607
        %v609 = vadd.bf16 %v585, %v607
        %v610 = vadd.bf16 %v586, %v607
        %v611 = vadd.bf16 %v587, %v607
        %v612 = vadd.bf16 %v588, %v607
        %v613 = vadd.bf16 %v589, %v607
        %v614 = vadd.bf16 %v590, %v607
        %v615 = vadd.bf16 %v591, %v607
        %v616 = vadd.bf16 %v592, %v607
        %v617 = vadd.bf16 %v593, %v607
        %v618 = vadd.bf16 %v594, %v607
        %v619 = vadd.bf16 %v595, %v607
        %v620 = vadd.bf16 %v596, %v607
        %v621 = vadd.bf16 %v597, %v607
        %v622 = vadd.bf16 %v598, %v607
        %v623 = vadd.bf16 %v599, %v607
        %v624 = vmax.bf16 %v608, 3231760544
        %v625 = vmax.bf16 %v609, 3231760544
        %v626 = vmax.bf16 %v610, 3231760544
        %v627 = vmax.bf16 %v611, 3231760544
        %v628 = vmax.bf16 %v612, 3231760544
        %v629 = vmax.bf16 %v613, 3231760544
        %v630 = vmax.bf16 %v614, 3231760544
        %v631 = vmax.bf16 %v615, 3231760544
        %v632 = vmax.bf16 %v616, 3231760544
        %v633 = vmax.bf16 %v617, 3231760544
        %v634 = vmax.bf16 %v618, 3231760544
        %v635 = vmax.bf16 %v619, 3231760544
        %v636 = vmax.bf16 %v620, 3231760544
        %v637 = vmax.bf16 %v621, 3231760544
        %v638 = vmax.bf16 %v622, 3231760544
        %v639 = vmax.bf16 %v623, 3231760544
        %v640 = vmin.bf16 %v624, 1084244128
        %v641 = vmin.bf16 %v625, 1084244128
        %v642 = vmin.bf16 %v626, 1084244128
        %v643 = vmin.bf16 %v627, 1084244128
        %v644 = vmin.bf16 %v628, 1084244128
        %v645 = vmin.bf16 %v629, 1084244128
        %v646 = vmin.bf16 %v630, 1084244128
        %v647 = vmin.bf16 %v631, 1084244128
        %v648 = vmin.bf16 %v632, 1084244128
        %v649 = vmin.bf16 %v633, 1084244128
        %v650 = vmin.bf16 %v634, 1084244128
        %v651 = vmin.bf16 %v635, 1084244128
        %v652 = vmin.bf16 %v636, 1084244128
        %v653 = vmin.bf16 %v637, 1084244128
        %v654 = vmin.bf16 %v638, 1084244128
        %v655 = vmin.bf16 %v639, 1084244128
        %v656 = vsub.bf16 %v608, %v640
        %v657 = vsub.bf16 %v609, %v641
        %v658 = vsub.bf16 %v610, %v642
        %v659 = vsub.bf16 %v611, %v643
        %v660 = vsub.bf16 %v612, %v644
        %v661 = vsub.bf16 %v613, %v645
        %v662 = vsub.bf16 %v614, %v646
        %v663 = vsub.bf16 %v615, %v647
        %v664 = vsub.bf16 %v616, %v648
        %v665 = vsub.bf16 %v617, %v649
        %v666 = vsub.bf16 %v618, %v650
        %v667 = vsub.bf16 %v619, %v651
        %v668 = vsub.bf16 %v620, %v652
        %v669 = vsub.bf16 %v621, %v653
        %v670 = vsub.bf16 %v622, %v654
        %v671 = vsub.bf16 %v623, %v655
        %v672 = vmul.bf16 %v656, 1009007652
        %v673 = vmul.bf16 %v657, 1009007652
        %v674 = vmul.bf16 %v658, 1009007652
        %v675 = vmul.bf16 %v659, 1009007652
        %v676 = vmul.bf16 %v660, 1009007652
        %v677 = vmul.bf16 %v661, 1009007652
        %v678 = vmul.bf16 %v662, 1009007652
        %v679 = vmul.bf16 %v663, 1009007652
        %v680 = vmul.bf16 %v664, 1009007652
        %v681 = vmul.bf16 %v665, 1009007652
        %v682 = vmul.bf16 %v666, 1009007652
        %v683 = vmul.bf16 %v667, 1009007652
        %v684 = vmul.bf16 %v668, 1009007652
        %v685 = vmul.bf16 %v669, 1009007652
        %v686 = vmul.bf16 %v670, 1009007652
        %v687 = vmul.bf16 %v671, 1009007652
        %v688 = vadd.bf16 %v640, %v672
        %v689 = vadd.bf16 %v641, %v673
        %v690 = vadd.bf16 %v642, %v674
        %v691 = vadd.bf16 %v643, %v675
        %v692 = vadd.bf16 %v644, %v676
        %v693 = vadd.bf16 %v645, %v677
        %v694 = vadd.bf16 %v646, %v678
        %v695 = vadd.bf16 %v647, %v679
        %v696 = vadd.bf16 %v648, %v680
        %v697 = vadd.bf16 %v649, %v681
        %v698 = vadd.bf16 %v650, %v682
        %v699 = vadd.bf16 %v651, %v683
        %v700 = vadd.bf16 %v652, %v684
        %v701 = vadd.bf16 %v653, %v685
        %v702 = vadd.bf16 %v654, %v686
        %v703 = vadd.bf16 %v655, %v687
        %v704 = vld [vmem:[%s3] sm:$0xf]
        %v705 = vld [vmem:[%s3 + $0x4] sm:$0xf]
        %v706 = vld [vmem:[%s3 + $0x8] sm:$0xf]
        %v707 = vld [vmem:[%s3 + $0xc] sm:$0xf]
        %v708 = vld [vmem:[%s3 + $0x10] sm:$0xf]
        %v709 = vld [vmem:[%s3 + $0x14] sm:$0xf]
        %v710 = vld [vmem:[%s3 + $0x18] sm:$0xf]
        %v711 = vld [vmem:[%s3 + $0x1c] sm:$0xf]
        %v712 = vld [vmem:[%s3 + $0x20] sm:$0xf]
        %v713 = vld [vmem:[%s3 + $0x24] sm:$0xf]
        %v714 = vld [vmem:[%s3 + $0x28] sm:$0xf]
        %v715 = vld [vmem:[%s3 + $0x2c] sm:$0xf]
        %v716 = vld [vmem:[%s3 + $0x30] sm:$0xf]
        %v717 = vld [vmem:[%s3 + $0x34] sm:$0xf]
        %v718 = vld [vmem:[%s3 + $0x38] sm:$0xf]
        %v719 = vld [vmem:[%s3 + $0x3c] sm:$0xf]
        %v736 = vunpack.c.l.b16 %v704
        %v737 = vunpack.c.l.b16 %v705
        %v738 = vunpack.c.l.b16 %v706
        %v739 = vunpack.c.l.b16 %v707
        %v740 = vunpack.c.l.b16 %v708
        %v741 = vunpack.c.l.b16 %v709
        %v742 = vunpack.c.l.b16 %v710
        %v743 = vunpack.c.l.b16 %v711
        %v744 = vunpack.c.l.b16 %v712
        %v745 = vunpack.c.l.b16 %v713
        %v746 = vunpack.c.l.b16 %v714
        %v747 = vunpack.c.l.b16 %v715
        %v748 = vunpack.c.l.b16 %v716
        %v749 = vunpack.c.l.b16 %v717
        %v750 = vunpack.c.l.b16 %v718
        %v751 = vunpack.c.l.b16 %v719
        %v752 = vpack.c.b16 %v737, %v736
        %v753 = vpack.c.b16 %v739, %v738
        %v754 = vpack.c.b16 %v741, %v740
        %v755 = vpack.c.b16 %v743, %v742
        %v756 = vpack.c.b16 %v745, %v744
        %v757 = vpack.c.b16 %v747, %v746
        %v758 = vpack.c.b16 %v749, %v748
        %v759 = vpack.c.b16 %v751, %v750
        %768 = vmatprep.subr.bf16.mxu0 0
        %769 = vmatpush1.bf16.msra.mxu0 %v759
        %770 = vmatprep.subr.bf16.mxu0 0
        %771 = vmatpush1.bf16.msra.mxu0 %v758
        %772 = vmatprep.subr.bf16.mxu0 0
        %773 = vmatpush1.bf16.msra.mxu0 %v757
        %774 = vmatprep.subr.bf16.mxu0 0
        %775 = vmatpush1.bf16.msra.mxu0 %v756
        %776 = vmatprep.subr.bf16.mxu0 0
        %777 = vmatpush1.bf16.msra.mxu0 %v755
        %778 = vmatprep.subr.bf16.mxu0 0
        %779 = vmatpush1.bf16.msra.mxu0 %v754
        %780 = vmatprep.subr.bf16.mxu0 0
        %781 = vmatpush1.bf16.msra.mxu0 %v753
        %782 = vmatprep.subr.bf16.mxu0 0
        %783 = vmatpush1.bf16.msra.mxu0 %v752
        %784 = vmatprep.subr.bf16.mxu0 0
        %785 = vmatpush2.bf16.msra.mxu0 0
        %786 = vmatprep.subr.bf16.mxu0 0
        %787 = vmatpush2.bf16.msra.mxu0 0
        %788 = vmatprep.subr.bf16.mxu0 0
        %789 = vmatpush2.bf16.msra.mxu0 0
        %790 = vmatprep.subr.bf16.mxu0 0
        %791 = vmatpush2.bf16.msra.mxu0 0
        %792 = vmatprep.subr.bf16.mxu0 0
        %793 = vmatpush2.bf16.msra.mxu0 0
        %794 = vmatprep.subr.bf16.mxu0 0
        %795 = vmatpush2.bf16.msra.mxu0 0
        %796 = vmatprep.subr.bf16.mxu0 0
        %797 = vmatpush2.bf16.msra.mxu0 0
        %798 = vmatprep.subr.bf16.mxu0 0
        %799 = vmatpush2.bf16.msra.mxu0 0
        %800 = vmatprep.mubr.bf16.mxu0 0
        %801 = vmatmul.mubr.bf16.gmra.mxu0 %v688
        %v802 = vpop.f32.mrf.mxu0
        %v803 = vadd.f32 0.0, %v802
        %v804 = vpop.f32.mrf.mxu0
        %v805 = vpop.f32.mrf.mxu0
        %v806 = vadd.f32 0.0, %v805
        %v807 = vpop.f32.mrf.mxu0
        %808 = vmatprep.mubr.bf16.mxu0 0
        %809 = vmatmul.mubr.bf16.gmra.mxu0 %v689
        %v810 = vpop.f32.mrf.mxu0
        %v811 = vadd.f32 0.0, %v810
        %v812 = vpop.f32.mrf.mxu0
        %v813 = vpop.f32.mrf.mxu0
        %v814 = vadd.f32 0.0, %v813
        %v815 = vpop.f32.mrf.mxu0
        %816 = vmatprep.mubr.bf16.mxu0 0
        %817 = vmatmul.mubr.bf16.gmra.mxu0 %v690
        %v818 = vpop.f32.mrf.mxu0
        %v819 = vadd.f32 0.0, %v818
        %v820 = vpop.f32.mrf.mxu0
        %v821 = vpop.f32.mrf.mxu0
        %v822 = vadd.f32 0.0, %v821
        %v823 = vpop.f32.mrf.mxu0
        %824 = vmatprep.mubr.bf16.mxu0 0
        %825 = vmatmul.mubr.bf16.gmra.mxu0 %v691
        %v826 = vpop.f32.mrf.mxu0
        %v827 = vadd.f32 0.0, %v826
        %v828 = vpop.f32.mrf.mxu0
        %v829 = vpop.f32.mrf.mxu0
        %v830 = vadd.f32 0.0, %v829
        %v831 = vpop.f32.mrf.mxu0
        %832 = vmatprep.mubr.bf16.mxu0 0
        %833 = vmatmul.mubr.bf16.gmra.mxu0 %v692
        %v834 = vpop.f32.mrf.mxu0
        %v835 = vadd.f32 0.0, %v834
        %v836 = vpop.f32.mrf.mxu0
        %v837 = vpop.f32.mrf.mxu0
        %v838 = vadd.f32 0.0, %v837
        %v839 = vpop.f32.mrf.mxu0
        %840 = vmatprep.mubr.bf16.mxu0 0
        %841 = vmatmul.mubr.bf16.gmra.mxu0 %v693
        %v842 = vpop.f32.mrf.mxu0
        %v843 = vadd.f32 0.0, %v842
        %v844 = vpop.f32.mrf.mxu0
        %v845 = vpop.f32.mrf.mxu0
        %v846 = vadd.f32 0.0, %v845
        %v847 = vpop.f32.mrf.mxu0
        %848 = vmatprep.mubr.bf16.mxu0 0
        %849 = vmatmul.mubr.bf16.gmra.mxu0 %v694
        %v850 = vpop.f32.mrf.mxu0
        %v851 = vadd.f32 0.0, %v850
        %v852 = vpop.f32.mrf.mxu0
        %v853 = vpop.f32.mrf.mxu0
        %v854 = vadd.f32 0.0, %v853
        %v855 = vpop.f32.mrf.mxu0
        %856 = vmatprep.mubr.bf16.mxu0 0
        %857 = vmatmul.mubr.bf16.gmra.mxu0 %v695
        %v858 = vpop.f32.mrf.mxu0
        %v859 = vadd.f32 0.0, %v858
        %v860 = vpop.f32.mrf.mxu0
        %v861 = vpop.f32.mrf.mxu0
        %v862 = vadd.f32 0.0, %v861
        %v863 = vpop.f32.mrf.mxu0
        %864 = vmatprep.mubr.bf16.mxu0 0
        %865 = vmatmul.mubr.bf16.gmra.mxu0 %v696
        %v866 = vpop.f32.mrf.mxu0
        %v867 = vadd.f32 0.0, %v866
        %v868 = vpop.f32.mrf.mxu0
        %v869 = vpop.f32.mrf.mxu0
        %v870 = vadd.f32 0.0, %v869
        %v871 = vpop.f32.mrf.mxu0
        %872 = vmatprep.mubr.bf16.mxu0 0
        %873 = vmatmul.mubr.bf16.gmra.mxu0 %v697
        %v874 = vpop.f32.mrf.mxu0
        %v875 = vadd.f32 0.0, %v874
        %v876 = vpop.f32.mrf.mxu0
        %v877 = vpop.f32.mrf.mxu0
        %v878 = vadd.f32 0.0, %v877
        %v879 = vpop.f32.mrf.mxu0
        %880 = vmatprep.mubr.bf16.mxu0 0
        %881 = vmatmul.mubr.bf16.gmra.mxu0 %v698
        %v882 = vpop.f32.mrf.mxu0
        %v883 = vadd.f32 0.0, %v882
        %v884 = vpop.f32.mrf.mxu0
        %v885 = vpop.f32.mrf.mxu0
        %v886 = vadd.f32 0.0, %v885
        %v887 = vpop.f32.mrf.mxu0
        %888 = vmatprep.mubr.bf16.mxu0 0
        %889 = vmatmul.mubr.bf16.gmra.mxu0 %v699
        %v890 = vpop.f32.mrf.mxu0
        %v891 = vadd.f32 0.0, %v890
        %v892 = vpop.f32.mrf.mxu0
        %v893 = vpop.f32.mrf.mxu0
        %v894 = vadd.f32 0.0, %v893
        %v895 = vpop.f32.mrf.mxu0
        %896 = vmatprep.mubr.bf16.mxu0 0
        %897 = vmatmul.mubr.bf16.gmra.mxu0 %v700
        %v898 = vpop.f32.mrf.mxu0
        %v899 = vadd.f32 0.0, %v898
        %v900 = vpop.f32.mrf.mxu0
        %v901 = vpop.f32.mrf.mxu0
        %v902 = vadd.f32 0.0, %v901
        %v903 = vpop.f32.mrf.mxu0
        %904 = vmatprep.mubr.bf16.mxu0 0
        %905 = vmatmul.mubr.bf16.gmra.mxu0 %v701
        %v906 = vpop.f32.mrf.mxu0
        %v907 = vadd.f32 0.0, %v906
        %v908 = vpop.f32.mrf.mxu0
        %v909 = vpop.f32.mrf.mxu0
        %v910 = vadd.f32 0.0, %v909
        %v911 = vpop.f32.mrf.mxu0
        %912 = vmatprep.mubr.bf16.mxu0 0
        %913 = vmatmul.mubr.bf16.gmra.mxu0 %v702
        %v914 = vpop.f32.mrf.mxu0
        %v915 = vadd.f32 0.0, %v914
        %v916 = vpop.f32.mrf.mxu0
        %v917 = vpop.f32.mrf.mxu0
        %v918 = vadd.f32 0.0, %v917
        %v919 = vpop.f32.mrf.mxu0
        %920 = vmatprep.mubr.bf16.mxu0 0
        %921 = vmatmul.mubr.bf16.gmra.mxu0 %v703
        %v922 = vpop.f32.mrf.mxu0
        %v923 = vadd.f32 0.0, %v922
        %v924 = vpop.f32.mrf.mxu0
        %v925 = vpop.f32.mrf.mxu0
        %v926 = vadd.f32 0.0, %v925
        %v927 = vpop.f32.mrf.mxu0
        %928 = vdwg.mxu0
        %v929 = vpack.c.bf16 %v806, %v803
        %v930 = vpack.c.bf16 %v814, %v811
        %v931 = vpack.c.bf16 %v822, %v819
        %v932 = vpack.c.bf16 %v830, %v827
        %v933 = vpack.c.bf16 %v838, %v835
        %v934 = vpack.c.bf16 %v846, %v843
        %v935 = vpack.c.bf16 %v854, %v851
        %v936 = vpack.c.bf16 %v862, %v859
        %v937 = vpack.c.bf16 %v870, %v867
        %v938 = vpack.c.bf16 %v878, %v875
        %v939 = vpack.c.bf16 %v886, %v883
        %v940 = vpack.c.bf16 %v894, %v891
        %v941 = vpack.c.bf16 %v902, %v899
        %v942 = vpack.c.bf16 %v910, %v907
        %v943 = vpack.c.bf16 %v918, %v915
        %v944 = vpack.c.bf16 %v926, %v923
        %v945 = vld [vmem:[%s4] sm:$0x1]
        %v947 = vpack.i.b16 %v945, %v945
        %v949 = vlaneseq
        %v950 = vshrl.u32 %v949, 7
        %v951 = vsub.s32 0, %v950
        %v952 = vrot.slane %v947, %v951
        %v953 = vadd.bf16 %v929, %v952
        %v954 = vadd.bf16 %v930, %v952
        %v955 = vadd.bf16 %v931, %v952
        %v956 = vadd.bf16 %v932, %v952
        %v957 = vadd.bf16 %v933, %v952
        %v958 = vadd.bf16 %v934, %v952
        %v959 = vadd.bf16 %v935, %v952
        %v960 = vadd.bf16 %v936, %v952
        %v961 = vadd.bf16 %v937, %v952
        %v962 = vadd.bf16 %v938, %v952
        %v963 = vadd.bf16 %v939, %v952
        %v964 = vadd.bf16 %v940, %v952
        %v965 = vadd.bf16 %v941, %v952
        %v966 = vadd.bf16 %v942, %v952
        %v967 = vadd.bf16 %v943, %v952
        %v968 = vadd.bf16 %v944, %v952
        %v969 = vmax.bf16 %v953, 3231760544
        %v970 = vmax.bf16 %v954, 3231760544
        %v971 = vmax.bf16 %v955, 3231760544
        %v972 = vmax.bf16 %v956, 3231760544
        %v973 = vmax.bf16 %v957, 3231760544
        %v974 = vmax.bf16 %v958, 3231760544
        %v975 = vmax.bf16 %v959, 3231760544
        %v976 = vmax.bf16 %v960, 3231760544
        %v977 = vmax.bf16 %v961, 3231760544
        %v978 = vmax.bf16 %v962, 3231760544
        %v979 = vmax.bf16 %v963, 3231760544
        %v980 = vmax.bf16 %v964, 3231760544
        %v981 = vmax.bf16 %v965, 3231760544
        %v982 = vmax.bf16 %v966, 3231760544
        %v983 = vmax.bf16 %v967, 3231760544
        %v984 = vmax.bf16 %v968, 3231760544
        %v985 = vmin.bf16 %v969, 1084244128
        %v986 = vmin.bf16 %v970, 1084244128
        %v987 = vmin.bf16 %v971, 1084244128
        %v988 = vmin.bf16 %v972, 1084244128
        %v989 = vmin.bf16 %v973, 1084244128
        %v990 = vmin.bf16 %v974, 1084244128
        %v991 = vmin.bf16 %v975, 1084244128
        %v992 = vmin.bf16 %v976, 1084244128
        %v993 = vmin.bf16 %v977, 1084244128
        %v994 = vmin.bf16 %v978, 1084244128
        %v995 = vmin.bf16 %v979, 1084244128
        %v996 = vmin.bf16 %v980, 1084244128
        %v997 = vmin.bf16 %v981, 1084244128
        %v998 = vmin.bf16 %v982, 1084244128
        %v999 = vmin.bf16 %v983, 1084244128
        %v1000 = vmin.bf16 %v984, 1084244128
        %v1001 = vsub.bf16 %v953, %v985
        %v1002 = vsub.bf16 %v954, %v986
        %v1003 = vsub.bf16 %v955, %v987
        %v1004 = vsub.bf16 %v956, %v988
        %v1005 = vsub.bf16 %v957, %v989
        %v1006 = vsub.bf16 %v958, %v990
        %v1007 = vsub.bf16 %v959, %v991
        %v1008 = vsub.bf16 %v960, %v992
        %v1009 = vsub.bf16 %v961, %v993
        %v1010 = vsub.bf16 %v962, %v994
        %v1011 = vsub.bf16 %v963, %v995
        %v1012 = vsub.bf16 %v964, %v996
        %v1013 = vsub.bf16 %v965, %v997
        %v1014 = vsub.bf16 %v966, %v998
        %v1015 = vsub.bf16 %v967, %v999
        %v1016 = vsub.bf16 %v968, %v1000
        %v1017 = vmul.bf16 %v1001, 1009007652
        %v1018 = vmul.bf16 %v1002, 1009007652
        %v1019 = vmul.bf16 %v1003, 1009007652
        %v1020 = vmul.bf16 %v1004, 1009007652
        %v1021 = vmul.bf16 %v1005, 1009007652
        %v1022 = vmul.bf16 %v1006, 1009007652
        %v1023 = vmul.bf16 %v1007, 1009007652
        %v1024 = vmul.bf16 %v1008, 1009007652
        %v1025 = vmul.bf16 %v1009, 1009007652
        %v1026 = vmul.bf16 %v1010, 1009007652
        %v1027 = vmul.bf16 %v1011, 1009007652
        %v1028 = vmul.bf16 %v1012, 1009007652
        %v1029 = vmul.bf16 %v1013, 1009007652
        %v1030 = vmul.bf16 %v1014, 1009007652
        %v1031 = vmul.bf16 %v1015, 1009007652
        %v1032 = vmul.bf16 %v1016, 1009007652
        %v1033 = vadd.bf16 %v985, %v1017
        %v1034 = vadd.bf16 %v986, %v1018
        %v1035 = vadd.bf16 %v987, %v1019
        %v1036 = vadd.bf16 %v988, %v1020
        %v1037 = vadd.bf16 %v989, %v1021
        %v1038 = vadd.bf16 %v990, %v1022
        %v1039 = vadd.bf16 %v991, %v1023
        %v1040 = vadd.bf16 %v992, %v1024
        %v1041 = vadd.bf16 %v993, %v1025
        %v1042 = vadd.bf16 %v994, %v1026
        %v1043 = vadd.bf16 %v995, %v1027
        %v1044 = vadd.bf16 %v996, %v1028
        %v1045 = vadd.bf16 %v997, %v1029
        %v1046 = vadd.bf16 %v998, %v1030
        %v1047 = vadd.bf16 %v999, %v1031
        %v1048 = vadd.bf16 %v1000, %v1032
        %v1049 = vld [vmem:[%s5] sm:$0xf]
        %v1050 = vld [vmem:[%s5 + $0x4] sm:$0xf]
        %v1051 = vld [vmem:[%s5 + $0x8] sm:$0xf]
        %v1052 = vld [vmem:[%s5 + $0xc] sm:$0xf]
        %v1053 = vld [vmem:[%s5 + $0x10] sm:$0xf]
        %v1054 = vld [vmem:[%s5 + $0x14] sm:$0xf]
        %v1055 = vld [vmem:[%s5 + $0x18] sm:$0xf]
        %v1056 = vld [vmem:[%s5 + $0x1c] sm:$0xf]
        %v1057 = vld [vmem:[%s5 + $0x20] sm:$0xf]
        %v1058 = vld [vmem:[%s5 + $0x24] sm:$0xf]
        %v1059 = vld [vmem:[%s5 + $0x28] sm:$0xf]
        %v1060 = vld [vmem:[%s5 + $0x2c] sm:$0xf]
        %v1061 = vld [vmem:[%s5 + $0x30] sm:$0xf]
        %v1062 = vld [vmem:[%s5 + $0x34] sm:$0xf]
        %v1063 = vld [vmem:[%s5 + $0x38] sm:$0xf]
        %v1064 = vld [vmem:[%s5 + $0x3c] sm:$0xf]
        %v1081 = vunpack.c.l.b16 %v1049
        %v1082 = vunpack.c.l.b16 %v1050
        %v1083 = vunpack.c.l.b16 %v1051
        %v1084 = vunpack.c.l.b16 %v1052
        %v1085 = vunpack.c.l.b16 %v1053
        %v1086 = vunpack.c.l.b16 %v1054
        %v1087 = vunpack.c.l.b16 %v1055
        %v1088 = vunpack.c.l.b16 %v1056
        %v1089 = vunpack.c.l.b16 %v1057
        %v1090 = vunpack.c.l.b16 %v1058
        %v1091 = vunpack.c.l.b16 %v1059
        %v1092 = vunpack.c.l.b16 %v1060
        %v1093 = vunpack.c.l.b16 %v1061
        %v1094 = vunpack.c.l.b16 %v1062
        %v1095 = vunpack.c.l.b16 %v1063
        %v1096 = vunpack.c.l.b16 %v1064
        %v1097 = vpack.c.b16 %v1082, %v1081
        %v1098 = vpack.c.b16 %v1084, %v1083
        %v1099 = vpack.c.b16 %v1086, %v1085
        %v1100 = vpack.c.b16 %v1088, %v1087
        %v1101 = vpack.c.b16 %v1090, %v1089
        %v1102 = vpack.c.b16 %v1092, %v1091
        %v1103 = vpack.c.b16 %v1094, %v1093
        %v1104 = vpack.c.b16 %v1096, %v1095
        %1113 = vmatprep.subr.bf16.mxu0 0
        %1114 = vmatpush1.bf16.msra.mxu0 %v1104
        %1115 = vmatprep.subr.bf16.mxu0 0
        %1116 = vmatpush1.bf16.msra.mxu0 %v1103
        %1117 = vmatprep.subr.bf16.mxu0 0
        %1118 = vmatpush1.bf16.msra.mxu0 %v1102
        %1119 = vmatprep.subr.bf16.mxu0 0
        %1120 = vmatpush1.bf16.msra.mxu0 %v1101
        %1121 = vmatprep.subr.bf16.mxu0 0
        %1122 = vmatpush1.bf16.msra.mxu0 %v1100
        %1123 = vmatprep.subr.bf16.mxu0 0
        %1124 = vmatpush1.bf16.msra.mxu0 %v1099
        %1125 = vmatprep.subr.bf16.mxu0 0
        %1126 = vmatpush1.bf16.msra.mxu0 %v1098
        %1127 = vmatprep.subr.bf16.mxu0 0
        %1128 = vmatpush1.bf16.msra.mxu0 %v1097
        %1129 = vmatprep.subr.bf16.mxu0 0
        %1130 = vmatpush2.bf16.msra.mxu0 0
        %1131 = vmatprep.subr.bf16.mxu0 0
        %1132 = vmatpush2.bf16.msra.mxu0 0
        %1133 = vmatprep.subr.bf16.mxu0 0
        %1134 = vmatpush2.bf16.msra.mxu0 0
        %1135 = vmatprep.subr.bf16.mxu0 0
        %1136 = vmatpush2.bf16.msra.mxu0 0
        %1137 = vmatprep.subr.bf16.mxu0 0
        %1138 = vmatpush2.bf16.msra.mxu0 0
        %1139 = vmatprep.subr.bf16.mxu0 0
        %1140 = vmatpush2.bf16.msra.mxu0 0
        %1141 = vmatprep.subr.bf16.mxu0 0
        %1142 = vmatpush2.bf16.msra.mxu0 0
        %1143 = vmatprep.subr.bf16.mxu0 0
        %1144 = vmatpush2.bf16.msra.mxu0 0
        %1145 = vmatprep.mubr.bf16.mxu0 0
        %1146 = vmatmul.mubr.bf16.gmra.mxu0 %v1033
        %v1147 = vpop.f32.mrf.mxu0
        %v1148 = vadd.f32 0.0, %v1147
        %v1149 = vpop.f32.mrf.mxu0
        %v1150 = vpop.f32.mrf.mxu0
        %v1151 = vadd.f32 0.0, %v1150
        %v1152 = vpop.f32.mrf.mxu0
        %1153 = vmatprep.mubr.bf16.mxu0 0
        %1154 = vmatmul.mubr.bf16.gmra.mxu0 %v1034
        %v1155 = vpop.f32.mrf.mxu0
        %v1156 = vadd.f32 0.0, %v1155
        %v1157 = vpop.f32.mrf.mxu0
        %v1158 = vpop.f32.mrf.mxu0
        %v1159 = vadd.f32 0.0, %v1158
        %v1160 = vpop.f32.mrf.mxu0
        %1161 = vmatprep.mubr.bf16.mxu0 0
        %1162 = vmatmul.mubr.bf16.gmra.mxu0 %v1035
        %v1163 = vpop.f32.mrf.mxu0
        %v1164 = vadd.f32 0.0, %v1163
        %v1165 = vpop.f32.mrf.mxu0
        %v1166 = vpop.f32.mrf.mxu0
        %v1167 = vadd.f32 0.0, %v1166
        %v1168 = vpop.f32.mrf.mxu0
        %1169 = vmatprep.mubr.bf16.mxu0 0
        %1170 = vmatmul.mubr.bf16.gmra.mxu0 %v1036
        %v1171 = vpop.f32.mrf.mxu0
        %v1172 = vadd.f32 0.0, %v1171
        %v1173 = vpop.f32.mrf.mxu0
        %v1174 = vpop.f32.mrf.mxu0
        %v1175 = vadd.f32 0.0, %v1174
        %v1176 = vpop.f32.mrf.mxu0
        %1177 = vmatprep.mubr.bf16.mxu0 0
        %1178 = vmatmul.mubr.bf16.gmra.mxu0 %v1037
        %v1179 = vpop.f32.mrf.mxu0
        %v1180 = vadd.f32 0.0, %v1179
        %v1181 = vpop.f32.mrf.mxu0
        %v1182 = vpop.f32.mrf.mxu0
        %v1183 = vadd.f32 0.0, %v1182
        %v1184 = vpop.f32.mrf.mxu0
        %1185 = vmatprep.mubr.bf16.mxu0 0
        %1186 = vmatmul.mubr.bf16.gmra.mxu0 %v1038
        %v1187 = vpop.f32.mrf.mxu0
        %v1188 = vadd.f32 0.0, %v1187
        %v1189 = vpop.f32.mrf.mxu0
        %v1190 = vpop.f32.mrf.mxu0
        %v1191 = vadd.f32 0.0, %v1190
        %v1192 = vpop.f32.mrf.mxu0
        %1193 = vmatprep.mubr.bf16.mxu0 0
        %1194 = vmatmul.mubr.bf16.gmra.mxu0 %v1039
        %v1195 = vpop.f32.mrf.mxu0
        %v1196 = vadd.f32 0.0, %v1195
        %v1197 = vpop.f32.mrf.mxu0
        %v1198 = vpop.f32.mrf.mxu0
        %v1199 = vadd.f32 0.0, %v1198
        %v1200 = vpop.f32.mrf.mxu0
        %1201 = vmatprep.mubr.bf16.mxu0 0
        %1202 = vmatmul.mubr.bf16.gmra.mxu0 %v1040
        %v1203 = vpop.f32.mrf.mxu0
        %v1204 = vadd.f32 0.0, %v1203
        %v1205 = vpop.f32.mrf.mxu0
        %v1206 = vpop.f32.mrf.mxu0
        %v1207 = vadd.f32 0.0, %v1206
        %v1208 = vpop.f32.mrf.mxu0
        %1209 = vmatprep.mubr.bf16.mxu0 0
        %1210 = vmatmul.mubr.bf16.gmra.mxu0 %v1041
        %v1211 = vpop.f32.mrf.mxu0
        %v1212 = vadd.f32 0.0, %v1211
        %v1213 = vpop.f32.mrf.mxu0
        %v1214 = vpop.f32.mrf.mxu0
        %v1215 = vadd.f32 0.0, %v1214
        %v1216 = vpop.f32.mrf.mxu0
        %1217 = vmatprep.mubr.bf16.mxu0 0
        %1218 = vmatmul.mubr.bf16.gmra.mxu0 %v1042
        %v1219 = vpop.f32.mrf.mxu0
        %v1220 = vadd.f32 0.0, %v1219
        %v1221 = vpop.f32.mrf.mxu0
        %v1222 = vpop.f32.mrf.mxu0
        %v1223 = vadd.f32 0.0, %v1222
        %v1224 = vpop.f32.mrf.mxu0
        %1225 = vmatprep.mubr.bf16.mxu0 0
        %1226 = vmatmul.mubr.bf16.gmra.mxu0 %v1043
        %v1227 = vpop.f32.mrf.mxu0
        %v1228 = vadd.f32 0.0, %v1227
        %v1229 = vpop.f32.mrf.mxu0
        %v1230 = vpop.f32.mrf.mxu0
        %v1231 = vadd.f32 0.0, %v1230
        %v1232 = vpop.f32.mrf.mxu0
        %1233 = vmatprep.mubr.bf16.mxu0 0
        %1234 = vmatmul.mubr.bf16.gmra.mxu0 %v1044
        %v1235 = vpop.f32.mrf.mxu0
        %v1236 = vadd.f32 0.0, %v1235
        %v1237 = vpop.f32.mrf.mxu0
        %v1238 = vpop.f32.mrf.mxu0
        %v1239 = vadd.f32 0.0, %v1238
        %v1240 = vpop.f32.mrf.mxu0
        %1241 = vmatprep.mubr.bf16.mxu0 0
        %1242 = vmatmul.mubr.bf16.gmra.mxu0 %v1045
        %v1243 = vpop.f32.mrf.mxu0
        %v1244 = vadd.f32 0.0, %v1243
        %v1245 = vpop.f32.mrf.mxu0
        %v1246 = vpop.f32.mrf.mxu0
        %v1247 = vadd.f32 0.0, %v1246
        %v1248 = vpop.f32.mrf.mxu0
        %1249 = vmatprep.mubr.bf16.mxu0 0
        %1250 = vmatmul.mubr.bf16.gmra.mxu0 %v1046
        %v1251 = vpop.f32.mrf.mxu0
        %v1252 = vadd.f32 0.0, %v1251
        %v1253 = vpop.f32.mrf.mxu0
        %v1254 = vpop.f32.mrf.mxu0
        %v1255 = vadd.f32 0.0, %v1254
        %v1256 = vpop.f32.mrf.mxu0
        %1257 = vmatprep.mubr.bf16.mxu0 0
        %1258 = vmatmul.mubr.bf16.gmra.mxu0 %v1047
        %v1259 = vpop.f32.mrf.mxu0
        %v1260 = vadd.f32 0.0, %v1259
        %v1261 = vpop.f32.mrf.mxu0
        %v1262 = vpop.f32.mrf.mxu0
        %v1263 = vadd.f32 0.0, %v1262
        %v1264 = vpop.f32.mrf.mxu0
        %1265 = vmatprep.mubr.bf16.mxu0 0
        %1266 = vmatmul.mubr.bf16.gmra.mxu0 %v1048
        %v1267 = vpop.f32.mrf.mxu0
        %v1268 = vadd.f32 0.0, %v1267
        %v1269 = vpop.f32.mrf.mxu0
        %v1270 = vpop.f32.mrf.mxu0
        %v1271 = vadd.f32 0.0, %v1270
        %v1272 = vpop.f32.mrf.mxu0
        %1273 = vdwg.mxu0
        %v1274 = vpack.c.bf16 %v1151, %v1148
        %v1275 = vpack.c.bf16 %v1159, %v1156
        %v1276 = vpack.c.bf16 %v1167, %v1164
        %v1277 = vpack.c.bf16 %v1175, %v1172
        %v1278 = vpack.c.bf16 %v1183, %v1180
        %v1279 = vpack.c.bf16 %v1191, %v1188
        %v1280 = vpack.c.bf16 %v1199, %v1196
        %v1281 = vpack.c.bf16 %v1207, %v1204
        %v1282 = vpack.c.bf16 %v1215, %v1212
        %v1283 = vpack.c.bf16 %v1223, %v1220
        %v1284 = vpack.c.bf16 %v1231, %v1228
        %v1285 = vpack.c.bf16 %v1239, %v1236
        %v1286 = vpack.c.bf16 %v1247, %v1244
        %v1287 = vpack.c.bf16 %v1255, %v1252
        %v1288 = vpack.c.bf16 %v1263, %v1260
        %v1289 = vpack.c.bf16 %v1271, %v1268
        %v1306 = vunpack.c.l.b16 %v1274
        %v1307 = vunpack.c.h.b16 %v1274
        %v1308 = vunpack.c.l.b16 %v1275
        %v1309 = vunpack.c.h.b16 %v1275
        %v1310 = vunpack.c.l.b16 %v1276
        %v1311 = vunpack.c.h.b16 %v1276
        %v1312 = vunpack.c.l.b16 %v1277
        %v1313 = vunpack.c.h.b16 %v1277
        %v1314 = vunpack.c.l.b16 %v1278
        %v1315 = vunpack.c.h.b16 %v1278
        %v1316 = vunpack.c.l.b16 %v1279
        %v1317 = vunpack.c.h.b16 %v1279
        %v1318 = vunpack.c.l.b16 %v1280
        %v1319 = vunpack.c.h.b16 %v1280
        %v1320 = vunpack.c.l.b16 %v1281
        %v1321 = vunpack.c.h.b16 %v1281
        %v1322 = vunpack.c.l.b16 %v1282
        %v1323 = vunpack.c.h.b16 %v1282
        %v1324 = vunpack.c.l.b16 %v1283
        %v1325 = vunpack.c.h.b16 %v1283
        %v1326 = vunpack.c.l.b16 %v1284
        %v1327 = vunpack.c.h.b16 %v1284
        %v1328 = vunpack.c.l.b16 %v1285
        %v1329 = vunpack.c.h.b16 %v1285
        %v1330 = vunpack.c.l.b16 %v1286
        %v1331 = vunpack.c.h.b16 %v1286
        %v1332 = vunpack.c.l.b16 %v1287
        %v1333 = vunpack.c.h.b16 %v1287
        %v1334 = vunpack.c.l.b16 %v1288
        %v1335 = vunpack.c.h.b16 %v1288
        %v1336 = vunpack.c.l.b16 %v1289
        %v1337 = vunpack.c.h.b16 %v1289
        %v1338 = vpack.c.b16 %v1306, %v1306
        %v1339 = vpack.c.b16 %v1307, %v1307
        %v1340 = vpack.c.b16 %v1308, %v1308
        %v1341 = vpack.c.b16 %v1309, %v1309
        %v1342 = vpack.c.b16 %v1310, %v1310
        %v1343 = vpack.c.b16 %v1311, %v1311
        %v1344 = vpack.c.b16 %v1312, %v1312
        %v1345 = vpack.c.b16 %v1313, %v1313
        %v1346 = vpack.c.b16 %v1314, %v1314
        %v1347 = vpack.c.b16 %v1315, %v1315
        %v1348 = vpack.c.b16 %v1316, %v1316
        %v1349 = vpack.c.b16 %v1317, %v1317
        %v1350 = vpack.c.b16 %v1318, %v1318
        %v1351 = vpack.c.b16 %v1319, %v1319
        %v1352 = vpack.c.b16 %v1320, %v1320
        %v1353 = vpack.c.b16 %v1321, %v1321
        %v1354 = vpack.c.b16 %v1322, %v1322
        %v1355 = vpack.c.b16 %v1323, %v1323
        %v1356 = vpack.c.b16 %v1324, %v1324
        %v1357 = vpack.c.b16 %v1325, %v1325
        %v1358 = vpack.c.b16 %v1326, %v1326
        %v1359 = vpack.c.b16 %v1327, %v1327
        %v1360 = vpack.c.b16 %v1328, %v1328
        %v1361 = vpack.c.b16 %v1329, %v1329
        %v1362 = vpack.c.b16 %v1330, %v1330
        %v1363 = vpack.c.b16 %v1331, %v1331
        %v1364 = vpack.c.b16 %v1332, %v1332
        %v1365 = vpack.c.b16 %v1333, %v1333
        %v1366 = vpack.c.b16 %v1334, %v1334
        %v1367 = vpack.c.b16 %v1335, %v1335
        %v1368 = vpack.c.b16 %v1336, %v1336
        %v1369 = vpack.c.b16 %v1337, %v1337
        %1402 = vst [vmem:[%s245] sm:$0xf] %v1338
        %1403 = vst [vmem:[%s245 + $0x4] sm:$0xf] %v1339
        %1404 = vst [vmem:[%s245 + $0x8] sm:$0xf] %v1340
        %1405 = vst [vmem:[%s245 + $0xc] sm:$0xf] %v1341
        %1406 = vst [vmem:[%s245 + $0x10] sm:$0xf] %v1342
        %1407 = vst [vmem:[%s245 + $0x14] sm:$0xf] %v1343
        %1408 = vst [vmem:[%s245 + $0x18] sm:$0xf] %v1344
        %1409 = vst [vmem:[%s245 + $0x1c] sm:$0xf] %v1345
        %1410 = vst [vmem:[%s245 + $0x20] sm:$0xf] %v1346
        %1411 = vst [vmem:[%s245 + $0x24] sm:$0xf] %v1347
        %1412 = vst [vmem:[%s245 + $0x28] sm:$0xf] %v1348
        %1413 = vst [vmem:[%s245 + $0x2c] sm:$0xf] %v1349
        %1414 = vst [vmem:[%s245 + $0x30] sm:$0xf] %v1350
        %1415 = vst [vmem:[%s245 + $0x34] sm:$0xf] %v1351
        %1416 = vst [vmem:[%s245 + $0x38] sm:$0xf] %v1352
        %1417 = vst [vmem:[%s245 + $0x3c] sm:$0xf] %v1353
        %1418 = vst [vmem:[%s245 + $0x40] sm:$0xf] %v1354
        %1419 = vst [vmem:[%s245 + $0x44] sm:$0xf] %v1355
        %1420 = vst [vmem:[%s245 + $0x48] sm:$0xf] %v1356
        %1421 = vst [vmem:[%s245 + $0x4c] sm:$0xf] %v1357
        %1422 = vst [vmem:[%s245 + $0x50] sm:$0xf] %v1358
        %1423 = vst [vmem:[%s245 + $0x54] sm:$0xf] %v1359
        %1424 = vst [vmem:[%s245 + $0x58] sm:$0xf] %v1360
        %1425 = vst [vmem:[%s245 + $0x5c] sm:$0xf] %v1361
        %1426 = vst [vmem:[%s245 + $0x60] sm:$0xf] %v1362
        %1427 = vst [vmem:[%s245 + $0x64] sm:$0xf] %v1363
        %1428 = vst [vmem:[%s245 + $0x68] sm:$0xf] %v1364
        %1429 = vst [vmem:[%s245 + $0x6c] sm:$0xf] %v1365
        %1430 = vst [vmem:[%s245 + $0x70] sm:$0xf] %v1366
        %1431 = vst [vmem:[%s245 + $0x74] sm:$0xf] %v1367
        %1432 = vst [vmem:[%s245 + $0x78] sm:$0xf] %v1368
        %1433 = vst [vmem:[%s245 + $0x7c] sm:$0xf] %v1369
        %s1434 = sand.u32 %s159, 1
        %s1435 = scalar_lea.sflag [#allocation3], %s1434
        %s1436 = sand.u32 %s159, 1
        %s1437 = smul.addr %s1436, 128
        %s1438 = scalar_lea.vmem [#allocation2], %s1437
        // Predicated region
        $region45: #{tpu_custom_call.1} parent=43 // pred_check
          %p1439 = pneg %p169
        $region46: #{tpu_custom_call.1} parent=43 // pred_check_branch
          %1441 = sbr.rel (%p1439) target = $region48
        $region47: #{tpu_custom_call.1} parent=43 // pred_region
          %s1442 = smul.u32 32, %s20
          %s1444 = ssub.s32 2048, 2048
          %1445 = vsyncadd %s1435, %s1444
          %s1446 = smul.addr %s1442, 64
          %s1447 = scalar_lea.hbm %s6, %s1446
          %s1448 = sshll.u32 %s1438, 4
          %s1449 = int_to_ptr.vmem [resolvable:$true] %s1448
          %1454 = dma.vmem_to_hbm [thread:$0]  %s1449, 2048, %s1447, %s1435, 64, 64, 4
        $region48: #{tpu_custom_call.1} parent=43 // pred_fallthru
          _
      $region44: #{tpu_custom_call.1} parent=5 // pred_fallthru
        _
      %p1455 = scmp.le.s32.totalorder 2, %s15
      // Predicated region
      $region49: #{tpu_custom_call.1} parent=5 // pred_check
        %p1456 = pneg %p1455
      $region50: #{tpu_custom_call.1} parent=5 // pred_check_branch
        %1458 = sbr.rel (%p1456) target = $region52
      $region51: #{tpu_custom_call.1} parent=5 // pred_region
        %s1459 = ssub.s32 %s15, 2
        // Predicated region
        $region53: #{tpu_custom_call.1} parent=51 // pred_check
          %p1460 = pneg %p175
        $region54: #{tpu_custom_call.1} parent=51 // pred_check_branch
          %1462 = sbr.rel (%p1460) target = $region56
        $region55: #{tpu_custom_call.1} parent=51 // pred_region
          %s1463 = sand.u32 %s160, 1
          %s1464 = scalar_lea.sflag [#allocation3], %s1463
          %s1465 = sand.u32 %s160, 1
          %s1466 = smul.addr %s1465, 128
          %s1467 = scalar_lea.vmem [#allocation2], %s1466
          %1468 = dma.done %s1464, 2048
        $region56: #{tpu_custom_call.1} parent=51 // pred_fallthru
          _
      $region52: #{tpu_custom_call.1} parent=5 // pred_fallthru
        _
    $region6: #{tpu_custom_call.1} parent=1 // loop_footer
      %s19 = sadd.s32 1, %s15
    $region7: #{tpu_custom_call.1} parent=1 // loop_footer_branch
      %14 = sbr.rel target = $region3
    $region8: #{tpu_custom_call.1} parent=1 // loop_exit
      _
    %1469 = vsyncpa [#allocation3], 1
    %s1470 = scalar_lea.sflag [#allocation3], 1
    %1471 = vsyncpa %s1470, 1

</llo_original>
